<compile_context>
chip_gen: v7x
topology: tpu7x:2x2x1
jax: 0.10.0
libtpu: 0.0.40
codegen_flags: <defaults>
</compile_context>

<pallas_src>
import functools
import math

import jax
import jax.numpy as jnp
from jax import lax
from jax.experimental import pallas as pl
from jax.experimental.pallas import tpu as pltpu

LN_EPS = 1e-5                         # torch nn.LayerNorm default
VMEM_LIMIT_BYTES = 48 * 1024 * 1024   # headroom under v7x's 64 MiB physical VMEM


# -------------------- math helpers (plain jnp; usable in/out of kernels) -------

def _layernorm(x, gamma, beta):
    # x: (R, N); gamma/beta: (1, N)
    mu = jnp.mean(x, axis=-1, keepdims=True)
    var = jnp.mean(jnp.square(x - mu), axis=-1, keepdims=True)
    return (x - mu) * lax.rsqrt(var + LN_EPS) * gamma + beta


def _gelu_exact(x):
    # torch.nn.functional.gelu default (erf based).
    # NOTE: jax.nn.gelu(approximate=True) would move this onto the EUP (tanh)
    # if bit-matching torch's exact GELU is not required.
    return 0.5 * x * (1.0 + lax.erf(x * (1.0 / math.sqrt(2.0))))


# --------------------------- fused gMLP stack kernel ---------------------------

def gmlp_stack_kernel(x_ref, ln1g_ref, ln1b_ref,
                      w1u_ref, b1u_ref, w1v_ref, b1v_ref,
                      ln2g_ref, ln2b_ref, wsp_ref, bsp_ref,
                      w2_ref, b2_ref, o_ref, *, seq_len, batch_tile):
    l = pl.program_id(1)

    # The output block is resident across the (innermost, "arbitrary") layer
    # axis; use it directly as the f32 residual-stream accumulator.
    @pl.when(l == 0)
    def _():
        o_ref[...] = x_ref[...]

    x = o_ref[...]                                             # (R, D) f32
    xn = _layernorm(x, ln1g_ref[0], ln1b_ref[0])
    xn_b = xn.astype(w1u_ref.dtype)

    # channel proj 1 split into two lane-aligned matmuls (u / v halves) + GELU
    u = jnp.dot(xn_b, w1u_ref[0], preferred_element_type=jnp.float32) + b1u_ref[0]
    v = jnp.dot(xn_b, w1v_ref[0], preferred_element_type=jnp.float32) + b1v_ref[0]
    u = _gelu_exact(u)                                         # (R, F)
    v = _gelu_exact(v)                                         # (R, F)

    # Spatial Gating Unit: LayerNorm over d_ffn, then Conv1d(seq, seq, k=1)
    # applied independently to each batch element inside the row tile.
    vn = _layernorm(v, ln2g_ref[0], ln2b_ref[0])               # (R, F) f32
    wsp = wsp_ref[0]                                           # (S, S)
    bsp = bsp_ref[0]                                           # (S, 1)
    parts = []
    for b in range(batch_tile):                                # static unroll
        blk = vn[b * seq_len:(b + 1) * seq_len, :].astype(wsp.dtype)
        parts.append(jnp.dot(wsp, blk, preferred_element_type=jnp.float32) + bsp)
    vs = parts[0] if batch_tile == 1 else jnp.concatenate(parts, axis=0)

    # gate, channel proj 2, residual
    g = (u * vs).astype(w2_ref.dtype)                          # (R, F)
    y = jnp.dot(g, w2_ref[0], preferred_element_type=jnp.float32) + b2_ref[0]
    o_ref[...] = y + x


# ------------------- NLU head kernel (vocab-tiled log-softmax) -----------------

def nlu_head_kernel(x_ref, w_ref, b_ref, o_ref, m_ref, s_ref, *,
                    num_v_tiles, v_tile):
    v = pl.program_id(1)

    @pl.when(v == 0)
    def _():
        m_ref[...] = jnp.full(m_ref.shape, -jnp.inf, jnp.float32)
        s_ref[...] = jnp.zeros(s_ref.shape, jnp.float32)

    logits = jnp.dot(x_ref[...].astype(w_ref.dtype), w_ref[...],
                     preferred_element_type=jnp.float32) + b_ref[...]

    # Stash raw logits for this vocab tile into the (rows, V) output block
    # (resident across the vocab axis); normalize in place on the last tile.
    if num_v_tiles == 1:
        o_ref[...] = logits
    else:
        col = pl.multiple_of(v * v_tile, v_tile)
        o_ref[:, pl.ds(col, v_tile)] = logits

    # online log-sum-exp accumulators
    m_prev = m_ref[...]
    m_new = jnp.maximum(m_prev, jnp.max(logits, axis=-1, keepdims=True))
    s_ref[...] = (s_ref[...] * jnp.exp(m_prev - m_new)
                  + jnp.sum(jnp.exp(logits - m_new), axis=-1, keepdims=True))
    m_ref[...] = m_new

    @pl.when(v == num_v_tiles - 1)
    def _():
        lse = m_ref[...] + jnp.log(s_ref[...])
        o_ref[...] = o_ref[...] - lse


# ------------------------------- kernel wrappers -------------------------------

def _largest_divisor_at_most(n, cap):
    for d in range(min(n, cap), 0, -1):
        if n % d == 0:
            return d
    return 1


def gmlp_stack(x, stacked, *, batch_tile=None):
    """Run all gMLP blocks in a single pallas_call."""
    B, S, D = x.shape
    L = stacked["w1_u"].shape[0]
    if batch_tile is None:
        # ~256 rows per tile for MXU M occupancy, but always whole batch
        # elements (the spatial mix couples all S positions of an element).
        batch_tile = _largest_divisor_at_most(B, max(1, 256 // S))
    row_tile = batch_tile * S
    rows = B * S
    xr = x.reshape(rows, D).astype(jnp.float32)

    def wspec(arr):
        nd = arr.ndim
        return pl.BlockSpec((1,) + tuple(arr.shape[1:]),
                            lambda r, l, _nd=nd: (l,) + (0,) * (_nd - 1))

    order = ("ln1_g", "ln1_b", "w1_u", "b1_u", "w1_v", "b1_v",
             "ln2_g", "ln2_b", "w_sp", "b_sp", "w2", "b2")
    weights = [stacked[k] for k in order]

    out = pl.pallas_call(
        functools.partial(gmlp_stack_kernel, seq_len=S, batch_tile=batch_tile),
        out_shape=jax.ShapeDtypeStruct((rows, D), jnp.float32),
        grid=(rows // row_tile, L),                 # layer (reduction) axis last
        in_specs=[pl.BlockSpec((row_tile, D), lambda r, l: (r, 0))]
                 + [wspec(w) for w in weights],
        out_specs=pl.BlockSpec((row_tile, D), lambda r, l: (r, 0)),
        compiler_params=pltpu.CompilerParams(
            dimension_semantics=("parallel", "arbitrary"),
            vmem_limit_bytes=VMEM_LIMIT_BYTES),
    )(xr, *weights)
    return out.reshape(B, S, D)


def nlu_head(x, w, b, *, row_tile=None, vocab_tile=None):
    """Linear(d_model -> vocab) + LogSoftmax with a vocab-tiled online LSE."""
    B, S, D = x.shape
    V = w.shape[1]
    rows = B * S
    if row_tile is None:
        row_tile = _largest_divisor_at_most(rows, 256)
    if vocab_tile is None:
        vocab_tile = V
        if V % 128 == 0 and V > 2048:               # stream big vocabularies
            for cand in (2048, 1024, 512, 256, 128):
                if V % cand == 0:
                    vocab_tile = cand
                    break
    num_v_tiles = V // vocab_tile
    xr = x.reshape(rows, D).astype(jnp.float32)

    out = pl.pallas_call(
        functools.partial(nlu_head_kernel, num_v_tiles=num_v_tiles,
                          v_tile=vocab_tile),
        out_shape=jax.ShapeDtypeStruct((rows, V), jnp.float32),
        grid=(rows // row_tile, num_v_tiles),       # vocab (reduction) axis last
        in_specs=[
            pl.BlockSpec((row_tile, D), lambda r, v: (r, 0)),
            pl.BlockSpec((D, vocab_tile), lambda r, v: (0, v)),
            pl.BlockSpec((1, vocab_tile), lambda r, v: (0, v)),
        ],
        out_specs=pl.BlockSpec((row_tile, V), lambda r, v: (r, 0)),
        scratch_shapes=[pltpu.VMEM((row_tile, 1), jnp.float32),   # running max
                        pltpu.VMEM((row_tile, 1), jnp.float32)],  # running sum
        compiler_params=pltpu.CompilerParams(
            dimension_semantics=("parallel", "arbitrary"),
            vmem_limit_bytes=VMEM_LIMIT_BYTES),
    )(xr, w, b.reshape(1, V))
    return out.reshape(B, S, V)


# ----------------------------- embedding (JAX glue) ----------------------------
# TODO(synk): the token/segment embedding gathers stay in plain JAX (data-
# dependent gather has no clean BlockSpec form at these shapes).

def sinusoidal_pos_encoding(max_len, d_model):
    pos = jnp.arange(max_len, dtype=jnp.float32)[:, None]
    i = jnp.arange(0, d_model, 2, dtype=jnp.float32)
    angle = pos / jnp.power(10000.0, i / d_model)
    pe = jnp.zeros((max_len, d_model), jnp.float32)
    pe = pe.at[:, 0::2].set(jnp.sin(angle))
    pe = pe.at[:, 1::2].set(jnp.cos(angle))
    return pe


def transformer_embedding(token_ids, token_type_ids, params):
    # token + positional + segment embedding; dropout(p=0.1) is identity in eval
    tok = jnp.take(params["tok_emb"], token_ids, axis=0)       # (B, S, D)
    seg = jnp.take(params["seg_emb"], token_type_ids, axis=0)  # (B, S, D)
    pos = params["pos_enc"][: token_ids.shape[1]]              # (S, D)
    return (tok + pos[None, :, :] + seg).astype(jnp.float32)


# --------------------------------- parameters ----------------------------------

def init_params(key, vocab_size, d_model, d_ffn, seq_len, num_layers,
                n_segments=2, weight_dtype=jnp.bfloat16):
    L, D, F, S = num_layers, d_model, d_ffn, seq_len
    ks = jax.random.split(key, 8)

    def nrm(k, shape, scale, dtype=weight_dtype):
        return (scale * jax.random.normal(k, shape, jnp.float32)).astype(dtype)

    return {
        "tok_emb": nrm(ks[0], (vocab_size, D), 0.02, jnp.float32),
        "seg_emb": nrm(ks[1], (n_segments, D), 0.02, jnp.float32),
        "pos_enc": sinusoidal_pos_encoding(S, D),
        "head_w": nrm(ks[2], (D, vocab_size), 0.02),
        "head_b": jnp.zeros((vocab_size,), jnp.float32),
        "stacked": {                                   # all layers stacked on L
            "ln1_g": jnp.ones((L, 1, D), jnp.float32),
            "ln1_b": jnp.zeros((L, 1, D), jnp.float32),
            "w1_u": nrm(ks[3], (L, D, F), 0.02),       # W1 split into u / v
            "b1_u": jnp.zeros((L, 1, F), jnp.float32),
            "w1_v": nrm(ks[4], (L, D, F), 0.02),
            "b1_v": jnp.zeros((L, 1, F), jnp.float32),
            "ln2_g": jnp.ones((L, 1, F), jnp.float32),
            "ln2_b": jnp.zeros((L, 1, F), jnp.float32),
            "w_sp": nrm(ks[5], (L, S, S), 0.01),       # spatial proj (small init)
            "b_sp": jnp.ones((L, S, 1), jnp.float32),  # bias = 1 (gMLP SGU conv.)
            "w2": nrm(ks[6], (L, F, D), 0.02),
            "b2": jnp.zeros((L, 1, D), jnp.float32),
        },
    }


# -------------------------------- full forward ---------------------------------

def gmlp_language_model(token_ids, token_type_ids, params, output_logits=True):
    x = transformer_embedding(token_ids, token_type_ids, params)
    x = gmlp_stack(x, params["stacked"])
    if output_logits:
        x = nlu_head(x, params["head_w"], params["head_b"])
    return x


# ------------------------------ pure-JAX reference ------------------------------

def gmlp_reference(token_ids, token_type_ids, params, output_logits=True):
    B, S = token_ids.shape
    st = params["stacked"]
    L = st["w1_u"].shape[0]
    x = transformer_embedding(token_ids, token_type_ids, params).reshape(B * S, -1)
    for l in range(L):
        res = x
        xn = _layernorm(x, st["ln1_g"][l], st["ln1_b"][l])
        xb = xn.astype(st["w1_u"].dtype)
        u = _gelu_exact(jnp.dot(xb, st["w1_u"][l],
                                preferred_element_type=jnp.float32) + st["b1_u"][l])
        v = _gelu_exact(jnp.dot(xb, st["w1_v"][l],
                                preferred_element_type=jnp.float32) + st["b1_v"][l])
        vn = _layernorm(v, st["ln2_g"][l], st["ln2_b"][l]).astype(st["w_sp"].dtype)
        vn3 = vn.reshape(B, S, -1)
        vs = jnp.einsum("ij,bjf->bif", st["w_sp"][l], vn3,
                        preferred_element_type=jnp.float32) + st["b_sp"][l][None]
        vs = vs.reshape(B * S, -1)
        g = (u * vs).astype(st["w2"].dtype)
        x = jnp.dot(g, st["w2"][l], preferred_element_type=jnp.float32) + st["b2"][l] + res
    if output_logits:
        logits = jnp.dot(x.astype(params["head_w"].dtype), params["head_w"],
                         preferred_element_type=jnp.float32) + params["head_b"]
        x = jax.nn.log_softmax(logits, axis=-1)
    return x.reshape(B, S, -1)


# ------------------------------------ main --------------------------------------

if __name__ == "__main__":
    VOCAB, D_MODEL, D_FFN, SEQ, LAYERS, BATCH = 64, 32, 64, 8, 2, 2

    key = jax.random.PRNGKey(0)
    k_tok, k_seg, k_par = jax.random.split(key, 3)

    token_ids = jax.random.randint(k_tok, (BATCH, SEQ), 0, VOCAB, dtype=jnp.int32)
    token_type_ids = jax.random.randint(k_seg, (BATCH, SEQ), 0, 2, dtype=jnp.int32)
    params = init_params(k_par, VOCAB, D_MODEL, D_FFN, SEQ, LAYERS)

    out = gmlp_language_model(token_ids, token_type_ids, params, output_logits=True)
    out = jax.block_until_ready(out)
    assert out.shape == (BATCH, SEQ, VOCAB)

    # log-softmax rows must (approximately) sum to 1 in probability space
    assert bool(jnp.all(jnp.abs(jnp.sum(jnp.exp(out), axis=-1) - 1.0) < 1e-4))

    # compare against a pure-JAX reference of the same math (bf16 weights)
    ref = gmlp_reference(token_ids, token_type_ids, params, output_logits=True)
    err = float(jnp.max(jnp.abs(out - ref)))
    assert err < 2e-2, f"max |pallas - reference| = {err}"

    print("KERNEL_OK")
</pallas_src>

<mosaic_0001>
module attributes {stable_mosaic.version = 11 : i64} {
  func.func @gmlp_stack_kernel(%arg0: i32, %arg1: i32, %arg2: memref<16x32xf32, #tpu.memory_space<vmem>>, %arg3: memref<1x1x32xf32, #tpu.memory_space<vmem>>, %arg4: memref<1x1x32xf32, #tpu.memory_space<vmem>>, %arg5: memref<1x32x64xbf16, #tpu.memory_space<vmem>>, %arg6: memref<1x1x64xf32, #tpu.memory_space<vmem>>, %arg7: memref<1x32x64xbf16, #tpu.memory_space<vmem>>, %arg8: memref<1x1x64xf32, #tpu.memory_space<vmem>>, %arg9: memref<1x1x64xf32, #tpu.memory_space<vmem>>, %arg10: memref<1x1x64xf32, #tpu.memory_space<vmem>>, %arg11: memref<1x8x8xbf16, #tpu.memory_space<vmem>>, %arg12: memref<1x8x1xf32, #tpu.memory_space<vmem>>, %arg13: memref<1x64x32xbf16, #tpu.memory_space<vmem>>, %arg14: memref<1x1x32xf32, #tpu.memory_space<vmem>>, %arg15: memref<16x32xf32, #tpu.memory_space<vmem>>) attributes {dimension_semantics = [#tpu.dimension_semantics<parallel>, #tpu.dimension_semantics<arbitrary>], iteration_bounds = array<i64: 1, 2>, scalar_prefetch = 0 : i64, scratch_operands = 0 : i64, tpu.core_type = #tpu.core_type<tc>, window_params = [{transform_indices = @transform_0, window_bounds = array<i64: 16, 32>}, {transform_indices = @transform_1, window_bounds = array<i64: 1, 1, 32>}, {transform_indices = @transform_2, window_bounds = array<i64: 1, 1, 32>}, {transform_indices = @transform_3, window_bounds = array<i64: 1, 32, 64>}, {transform_indices = @transform_4, window_bounds = array<i64: 1, 1, 64>}, {transform_indices = @transform_5, window_bounds = array<i64: 1, 32, 64>}, {transform_indices = @transform_6, window_bounds = array<i64: 1, 1, 64>}, {transform_indices = @transform_7, window_bounds = array<i64: 1, 1, 64>}, {transform_indices = @transform_8, window_bounds = array<i64: 1, 1, 64>}, {transform_indices = @transform_9, window_bounds = array<i64: 1, 8, 8>}, {transform_indices = @transform_10, window_bounds = array<i64: 1, 8, 1>}, {transform_indices = @transform_11, window_bounds = array<i64: 1, 64, 32>}, {transform_indices = @transform_12, window_bounds = array<i64: 1, 1, 32>}, {transform_indices = @transform_13, window_bounds = array<i64: 16, 32>}]} {
    %c0_i32 = arith.constant 0 : i32
    %0 = arith.cmpi eq, %arg1, %c0_i32 : i32
    %1 = arith.extui %0 : i1 to i32
    %c0_i32_0 = arith.constant 0 : i32
    %2 = arith.cmpi ne, %1, %c0_i32_0 : i32
    scf.if %2 {
      %c0_60 = arith.constant 0 : index
      %c0_61 = arith.constant 0 : index
      %113 = vector.load %arg2[%c0_60, %c0_61] : memref<16x32xf32, #tpu.memory_space<vmem>>, vector<16x32xf32>
      %c0_62 = arith.constant 0 : index
      %c0_63 = arith.constant 0 : index
      %114 = vector.load %arg15[%c0_62, %c0_63] : memref<16x32xf32, #tpu.memory_space<vmem>>, vector<16x32xf32>
      tpu.vector_store %arg15[%c0_62, %c0_63], %113 {strides = array<i32>} : memref<16x32xf32, #tpu.memory_space<vmem>>, vector<16x32xf32>,
    } else {
    }
    %c0 = arith.constant 0 : index
    %c0_1 = arith.constant 0 : index
    %3 = vector.load %arg15[%c0, %c0_1] : memref<16x32xf32, #tpu.memory_space<vmem>>, vector<16x32xf32>
    %c0_2 = arith.constant 0 : index
    %c0_3 = arith.constant 0 : index
    %c0_4 = arith.constant 0 : index
    %4 = vector.load %arg3[%c0_2, %c0_3, %c0_4] : memref<1x1x32xf32, #tpu.memory_space<vmem>>, vector<1x1x32xf32>
    %5 = vector.shape_cast %4 : vector<1x1x32xf32> to vector<1x32xf32>
    %c0_5 = arith.constant 0 : index
    %c0_6 = arith.constant 0 : index
    %c0_7 = arith.constant 0 : index
    %6 = vector.load %arg4[%c0_5, %c0_6, %c0_7] : memref<1x1x32xf32, #tpu.memory_space<vmem>>, vector<1x1x32xf32>
    %7 = vector.shape_cast %6 : vector<1x1x32xf32> to vector<1x32xf32>
    %cst = arith.constant dense<0.000000e+00> : vector<16xf32>
    %8 = vector.multi_reduction <add>, %3, %cst [1] : vector<16x32xf32> to vector<16xf32>
    %9 = vector.shape_cast %8 : vector<16xf32> to vector<16x1xf32>
    %cst_8 = arith.constant 3.200000e+01 : f32
    %10 = vector.broadcast %cst_8 : f32 to vector<16x1xf32>
    %11 = arith.divf %9, %10 : vector<16x1xf32>
    %12 = vector.broadcast %11 : vector<16x1xf32> to vector<16x32xf32>
    %13 = arith.subf %3, %12 : vector<16x32xf32>
    %14 = arith.mulf %13, %13 : vector<16x32xf32>
    %cst_9 = arith.constant dense<0.000000e+00> : vector<16xf32>
    %15 = vector.multi_reduction <add>, %14, %cst_9 [1] : vector<16x32xf32> to vector<16xf32>
    %16 = vector.shape_cast %15 : vector<16xf32> to vector<16x1xf32>
    %cst_10 = arith.constant 3.200000e+01 : f32
    %17 = vector.broadcast %cst_10 : f32 to vector<16x1xf32>
    %18 = arith.divf %16, %17 : vector<16x1xf32>
    %19 = vector.broadcast %11 : vector<16x1xf32> to vector<16x32xf32>
    %20 = arith.subf %3, %19 : vector<16x32xf32>
    %cst_11 = arith.constant 9.99999974E-6 : f32
    %21 = vector.broadcast %cst_11 : f32 to vector<16x1xf32>
    %22 = arith.addf %18, %21 : vector<16x1xf32>
    %23 = math.rsqrt %22 : vector<16x1xf32>
    %24 = vector.broadcast %23 : vector<16x1xf32> to vector<16x32xf32>
    %25 = arith.mulf %20, %24 : vector<16x32xf32>
    %26 = vector.broadcast %5 : vector<1x32xf32> to vector<16x32xf32>
    %27 = arith.mulf %25, %26 : vector<16x32xf32>
    %28 = vector.broadcast %7 : vector<1x32xf32> to vector<16x32xf32>
    %29 = arith.addf %27, %28 : vector<16x32xf32>
    %30 = arith.truncf %29 : vector<16x32xf32> to vector<16x32xbf16>
    %c0_12 = arith.constant 0 : index
    %c0_13 = arith.constant 0 : index
    %c0_14 = arith.constant 0 : index
    %31 = vector.load %arg5[%c0_12, %c0_13, %c0_14] : memref<1x32x64xbf16, #tpu.memory_space<vmem>>, vector<1x32x64xbf16>
    %32 = vector.shape_cast %31 : vector<1x32x64xbf16> to vector<32x64xbf16>
    %cst_15 = arith.constant dense<0.000000e+00> : vector<16x64xf32>
    %33 = tpu.matmul %30, %32, %cst_15 {dimension_numbers = #tpu.dot_dimension_numbers<[1], [0], [0], [1], [0, 0, 1, 1], [], []>} : vector<16x32xbf16>, vector<32x64xbf16>, vector<16x64xf32> -> vector<16x64xf32>
    %c0_16 = arith.constant 0 : index
    %c0_17 = arith.constant 0 : index
    %c0_18 = arith.constant 0 : index
    %34 = vector.load %arg6[%c0_16, %c0_17, %c0_18] : memref<1x1x64xf32, #tpu.memory_space<vmem>>, vector<1x1x64xf32>
    %35 = vector.shape_cast %34 : vector<1x1x64xf32> to vector<1x64xf32>
    %36 = vector.broadcast %35 : vector<1x64xf32> to vector<16x64xf32>
    %37 = arith.addf %33, %36 : vector<16x64xf32>
    %c0_19 = arith.constant 0 : index
    %c0_20 = arith.constant 0 : index
    %c0_21 = arith.constant 0 : index
    %38 = vector.load %arg7[%c0_19, %c0_20, %c0_21] : memref<1x32x64xbf16, #tpu.memory_space<vmem>>, vector<1x32x64xbf16>
    %39 = vector.shape_cast %38 : vector<1x32x64xbf16> to vector<32x64xbf16>
    %cst_22 = arith.constant dense<0.000000e+00> : vector<16x64xf32>
    %40 = tpu.matmul %30, %39, %cst_22 {dimension_numbers = #tpu.dot_dimension_numbers<[1], [0], [0], [1], [0, 0, 1, 1], [], []>} : vector<16x32xbf16>, vector<32x64xbf16>, vector<16x64xf32> -> vector<16x64xf32>
    %c0_23 = arith.constant 0 : index
    %c0_24 = arith.constant 0 : index
    %c0_25 = arith.constant 0 : index
    %41 = vector.load %arg8[%c0_23, %c0_24, %c0_25] : memref<1x1x64xf32, #tpu.memory_space<vmem>>, vector<1x1x64xf32>
    %42 = vector.shape_cast %41 : vector<1x1x64xf32> to vector<1x64xf32>
    %43 = vector.broadcast %42 : vector<1x64xf32> to vector<16x64xf32>
    %44 = arith.addf %40, %43 : vector<16x64xf32>
    %cst_26 = arith.constant 5.000000e-01 : f32
    %45 = vector.broadcast %cst_26 : f32 to vector<16x64xf32>
    %46 = arith.mulf %45, %37 : vector<16x64xf32>
    %cst_27 = arith.constant 0.707106769 : f32
    %47 = vector.broadcast %cst_27 : f32 to vector<16x64xf32>
    %48 = arith.mulf %37, %47 : vector<16x64xf32>
    %49 = math.erf %48 : vector<16x64xf32>
    %cst_28 = arith.constant 1.000000e+00 : f32
    %50 = vector.broadcast %cst_28 : f32 to vector<16x64xf32>
    %51 = arith.addf %50, %49 : vector<16x64xf32>
    %52 = arith.mulf %46, %51 : vector<16x64xf32>
    %cst_29 = arith.constant 5.000000e-01 : f32
    %53 = vector.broadcast %cst_29 : f32 to vector<16x64xf32>
    %54 = arith.mulf %53, %44 : vector<16x64xf32>
    %cst_30 = arith.constant 0.707106769 : f32
    %55 = vector.broadcast %cst_30 : f32 to vector<16x64xf32>
    %56 = arith.mulf %44, %55 : vector<16x64xf32>
    %57 = math.erf %56 : vector<16x64xf32>
    %cst_31 = arith.constant 1.000000e+00 : f32
    %58 = vector.broadcast %cst_31 : f32 to vector<16x64xf32>
    %59 = arith.addf %58, %57 : vector<16x64xf32>
    %60 = arith.mulf %54, %59 : vector<16x64xf32>
    %c0_32 = arith.constant 0 : index
    %c0_33 = arith.constant 0 : index
    %c0_34 = arith.constant 0 : index
    %61 = vector.load %arg9[%c0_32, %c0_33, %c0_34] : memref<1x1x64xf32, #tpu.memory_space<vmem>>, vector<1x1x64xf32>
    %62 = vector.shape_cast %61 : vector<1x1x64xf32> to vector<1x64xf32>
    %c0_35 = arith.constant 0 : index
    %c0_36 = arith.constant 0 : index
    %c0_37 = arith.constant 0 : index
    %63 = vector.load %arg10[%c0_35, %c0_36, %c0_37] : memref<1x1x64xf32, #tpu.memory_space<vmem>>, vector<1x1x64xf32>
    %64 = vector.shape_cast %63 : vector<1x1x64xf32> to vector<1x64xf32>
    %cst_38 = arith.constant dense<0.000000e+00> : vector<16xf32>
    %65 = vector.multi_reduction <add>, %60, %cst_38 [1] : vector<16x64xf32> to vector<16xf32>
    %66 = vector.shape_cast %65 : vector<16xf32> to vector<16x1xf32>
    %cst_39 = arith.constant 6.400000e+01 : f32
    %67 = vector.broadcast %cst_39 : f32 to vector<16x1xf32>
    %68 = arith.divf %66, %67 : vector<16x1xf32>
    %69 = vector.broadcast %68 : vector<16x1xf32> to vector<16x64xf32>
    %70 = arith.subf %60, %69 : vector<16x64xf32>
    %71 = arith.mulf %70, %70 : vector<16x64xf32>
    %cst_40 = arith.constant dense<0.000000e+00> : vector<16xf32>
    %72 = vector.multi_reduction <add>, %71, %cst_40 [1] : vector<16x64xf32> to vector<16xf32>
    %73 = vector.shape_cast %72 : vector<16xf32> to vector<16x1xf32>
    %cst_41 = arith.constant 6.400000e+01 : f32
    %74 = vector.broadcast %cst_41 : f32 to vector<16x1xf32>
    %75 = arith.divf %73, %74 : vector<16x1xf32>
    %76 = vector.broadcast %68 : vector<16x1xf32> to vector<16x64xf32>
    %77 = arith.subf %60, %76 : vector<16x64xf32>
    %cst_42 = arith.constant 9.99999974E-6 : f32
    %78 = vector.broadcast %cst_42 : f32 to vector<16x1xf32>
    %79 = arith.addf %75, %78 : vector<16x1xf32>
    %80 = math.rsqrt %79 : vector<16x1xf32>
    %81 = vector.broadcast %80 : vector<16x1xf32> to vector<16x64xf32>
    %82 = arith.mulf %77, %81 : vector<16x64xf32>
    %83 = vector.broadcast %62 : vector<1x64xf32> to vector<16x64xf32>
    %84 = arith.mulf %82, %83 : vector<16x64xf32>
    %85 = vector.broadcast %64 : vector<1x64xf32> to vector<16x64xf32>
    %86 = arith.addf %84, %85 : vector<16x64xf32>
    %c0_43 = arith.constant 0 : index
    %c0_44 = arith.constant 0 : index
    %c0_45 = arith.constant 0 : index
    %87 = vector.load %arg11[%c0_43, %c0_44, %c0_45] : memref<1x8x8xbf16, #tpu.memory_space<vmem>>, vector<1x8x8xbf16>
    %88 = vector.shape_cast %87 : vector<1x8x8xbf16> to vector<8x8xbf16>
    %c0_46 = arith.constant 0 : index
    %c0_47 = arith.constant 0 : index
    %c0_48 = arith.constant 0 : index
    %89 = vector.load %arg12[%c0_46, %c0_47, %c0_48] : memref<1x8x1xf32, #tpu.memory_space<vmem>>, vector<1x8x1xf32>
    %90 = vector.shape_cast %89 : vector<1x8x1xf32> to vector<8x1xf32>
    %91 = vector.extract_strided_slice %86 {offsets = [0, 0], sizes = [8, 64], strides = [1, 1]} : vector<16x64xf32> to vector<8x64xf32>
    %92 = arith.truncf %91 : vector<8x64xf32> to vector<8x64xbf16>
    %cst_49 = arith.constant dense<0.000000e+00> : vector<8x64xf32>
    %93 = tpu.matmul %88, %92, %cst_49 {dimension_numbers = #tpu.dot_dimension_numbers<[1], [0], [0], [1], [0, 0, 1, 1], [], []>} : vector<8x8xbf16>, vector<8x64xbf16>, vector<8x64xf32> -> vector<8x64xf32>
    %94 = vector.broadcast %90 : vector<8x1xf32> to vector<8x64xf32>
    %95 = arith.addf %93, %94 : vector<8x64xf32>
    %96 = vector.extract_strided_slice %86 {offsets = [8, 0], sizes = [8, 64], strides = [1, 1]} : vector<16x64xf32> to vector<8x64xf32>
    %97 = arith.truncf %96 : vector<8x64xf32> to vector<8x64xbf16>
    %cst_50 = arith.constant dense<0.000000e+00> : vector<8x64xf32>
    %98 = tpu.matmul %88, %97, %cst_50 {dimension_numbers = #tpu.dot_dimension_numbers<[1], [0], [0], [1], [0, 0, 1, 1], [], []>} : vector<8x8xbf16>, vector<8x64xbf16>, vector<8x64xf32> -> vector<8x64xf32>
    %99 = vector.broadcast %90 : vector<8x1xf32> to vector<8x64xf32>
    %100 = arith.addf %98, %99 : vector<8x64xf32>
    %101 = tpu.concatenate %95, %100 in 0 : vector<8x64xf32>, vector<8x64xf32> -> vector<16x64xf32>
    %102 = arith.mulf %52, %101 : vector<16x64xf32>
    %103 = arith.truncf %102 : vector<16x64xf32> to vector<16x64xbf16>
    %c0_51 = arith.constant 0 : index
    %c0_52 = arith.constant 0 : index
    %c0_53 = arith.constant 0 : index
    %104 = vector.load %arg13[%c0_51, %c0_52, %c0_53] : memref<1x64x32xbf16, #tpu.memory_space<vmem>>, vector<1x64x32xbf16>
    %105 = vector.shape_cast %104 : vector<1x64x32xbf16> to vector<64x32xbf16>
    %cst_54 = arith.constant dense<0.000000e+00> : vector<16x32xf32>
    %106 = tpu.matmul %103, %105, %cst_54 {dimension_numbers = #tpu.dot_dimension_numbers<[1], [0], [0], [1], [0, 0, 1, 1], [], []>} : vector<16x64xbf16>, vector<64x32xbf16>, vector<16x32xf32> -> vector<16x32xf32>
    %c0_55 = arith.constant 0 : index
    %c0_56 = arith.constant 0 : index
    %c0_57 = arith.constant 0 : index
    %107 = vector.load %arg14[%c0_55, %c0_56, %c0_57] : memref<1x1x32xf32, #tpu.memory_space<vmem>>, vector<1x1x32xf32>
    %108 = vector.shape_cast %107 : vector<1x1x32xf32> to vector<1x32xf32>
    %109 = vector.broadcast %108 : vector<1x32xf32> to vector<16x32xf32>
    %110 = arith.addf %106, %109 : vector<16x32xf32>
    %111 = arith.addf %110, %3 : vector<16x32xf32>
    %c0_58 = arith.constant 0 : index
    %c0_59 = arith.constant 0 : index
    %112 = vector.load %arg15[%c0_58, %c0_59] : memref<16x32xf32, #tpu.memory_space<vmem>>, vector<16x32xf32>
    tpu.vector_store %arg15[%c0_58, %c0_59], %111 {strides = array<i32>} : memref<16x32xf32, #tpu.memory_space<vmem>>, vector<16x32xf32>,
    return
  }
  func.func @transform_0(%arg0: i32, %arg1: i32) -> (i32, i32) {
    %c0_i32 = arith.constant 0 : i32
    %c0_i32_0 = arith.constant 0 : i32
    return %arg0, %c0_i32 : i32, i32
  }
  func.func @transform_1(%arg0: i32, %arg1: i32) -> (i32, i32, i32) {
    %c0_i32 = arith.constant 0 : i32
    %c0_i32_0 = arith.constant 0 : i32
    %c0_i32_1 = arith.constant 0 : i32
    return %arg1, %c0_i32, %c0_i32_0 : i32, i32, i32
  }
  func.func @transform_2(%arg0: i32, %arg1: i32) -> (i32, i32, i32) {
    %c0_i32 = arith.constant 0 : i32
    %c0_i32_0 = arith.constant 0 : i32
    %c0_i32_1 = arith.constant 0 : i32
    return %arg1, %c0_i32, %c0_i32_0 : i32, i32, i32
  }
  func.func @transform_3(%arg0: i32, %arg1: i32) -> (i32, i32, i32) {
    %c0_i32 = arith.constant 0 : i32
    %c0_i32_0 = arith.constant 0 : i32
    %c0_i32_1 = arith.constant 0 : i32
    return %arg1, %c0_i32, %c0_i32_0 : i32, i32, i32
  }
  func.func @transform_4(%arg0: i32, %arg1: i32) -> (i32, i32, i32) {
    %c0_i32 = arith.constant 0 : i32
    %c0_i32_0 = arith.constant 0 : i32
    %c0_i32_1 = arith.constant 0 : i32
    return %arg1, %c0_i32, %c0_i32_0 : i32, i32, i32
  }
  func.func @transform_5(%arg0: i32, %arg1: i32) -> (i32, i32, i32) {
    %c0_i32 = arith.constant 0 : i32
    %c0_i32_0 = arith.constant 0 : i32
    %c0_i32_1 = arith.constant 0 : i32
    return %arg1, %c0_i32, %c0_i32_0 : i32, i32, i32
  }
  func.func @transform_6(%arg0: i32, %arg1: i32) -> (i32, i32, i32) {
    %c0_i32 = arith.constant 0 : i32
    %c0_i32_0 = arith.constant 0 : i32
    %c0_i32_1 = arith.constant 0 : i32
    return %arg1, %c0_i32, %c0_i32_0 : i32, i32, i32
  }
  func.func @transform_7(%arg0: i32, %arg1: i32) -> (i32, i32, i32) {
    %c0_i32 = arith.constant 0 : i32
    %c0_i32_0 = arith.constant 0 : i32
    %c0_i32_1 = arith.constant 0 : i32
    return %arg1, %c0_i32, %c0_i32_0 : i32, i32, i32
  }
  func.func @transform_8(%arg0: i32, %arg1: i32) -> (i32, i32, i32) {
    %c0_i32 = arith.constant 0 : i32
    %c0_i32_0 = arith.constant 0 : i32
    %c0_i32_1 = arith.constant 0 : i32
    return %arg1, %c0_i32, %c0_i32_0 : i32, i32, i32
  }
  func.func @transform_9(%arg0: i32, %arg1: i32) -> (i32, i32, i32) {
    %c0_i32 = arith.constant 0 : i32
    %c0_i32_0 = arith.constant 0 : i32
    %c0_i32_1 = arith.constant 0 : i32
    return %arg1, %c0_i32, %c0_i32_0 : i32, i32, i32
  }
  func.func @transform_10(%arg0: i32, %arg1: i32) -> (i32, i32, i32) {
    %c0_i32 = arith.constant 0 : i32
    %c0_i32_0 = arith.constant 0 : i32
    %c0_i32_1 = arith.constant 0 : i32
    return %arg1, %c0_i32, %c0_i32_0 : i32, i32, i32
  }
  func.func @transform_11(%arg0: i32, %arg1: i32) -> (i32, i32, i32) {
    %c0_i32 = arith.constant 0 : i32
    %c0_i32_0 = arith.constant 0 : i32
    %c0_i32_1 = arith.constant 0 : i32
    return %arg1, %c0_i32, %c0_i32_0 : i32, i32, i32
  }
  func.func @transform_12(%arg0: i32, %arg1: i32) -> (i32, i32, i32) {
    %c0_i32 = arith.constant 0 : i32
    %c0_i32_0 = arith.constant 0 : i32
    %c0_i32_1 = arith.constant 0 : i32
    return %arg1, %c0_i32, %c0_i32_0 : i32, i32, i32
  }
  func.func @transform_13(%arg0: i32, %arg1: i32) -> (i32, i32) {
    %c0_i32 = arith.constant 0 : i32
    %c0_i32_0 = arith.constant 0 : i32
    return %arg0, %c0_i32 : i32, i32
  }
}

</mosaic_0001>

<llo_original>
// kernel: tpu_custom_call.1
$region0: #{tpu_custom_call.1}
  #allocation0 [shape = 'u32[]', space=smem, size = 0x4, offset = 0x4, fixed_abs, tag = 'smem constant byte address 0x4 - core index']
  #allocation1 [shape = 'u32[144,128]{1,0:T(1,128)}', space=vmem, size = 0x12000, scoped, tag = 'internal scratch']
  %s0 = inlined_call_operand.vmem [shape: f32[16,32], index: 0, kind: input, shape index: {}]
  %s1 = inlined_call_operand.vmem [shape: f32[2,1,32], index: 1, kind: input, shape index: {}]
  %s2 = inlined_call_operand.vmem [shape: f32[2,1,32], index: 2, kind: input, shape index: {}]
  %s3 = inlined_call_operand.vmem [shape: bf16[2,32,64], index: 3, kind: input, shape index: {}]
  %s4 = inlined_call_operand.vmem [shape: f32[2,1,64], index: 4, kind: input, shape index: {}]
  %s5 = inlined_call_operand.vmem [shape: bf16[2,32,64], index: 5, kind: input, shape index: {}]
  %s6 = inlined_call_operand.vmem [shape: f32[2,1,64], index: 6, kind: input, shape index: {}]
  %s7 = inlined_call_operand.vmem [shape: f32[2,1,64], index: 7, kind: input, shape index: {}]
  %s8 = inlined_call_operand.vmem [shape: f32[2,1,64], index: 8, kind: input, shape index: {}]
  %s9 = inlined_call_operand.vmem [shape: bf16[2,8,8], index: 9, kind: input, shape index: {}]
  %s10 = inlined_call_operand.vmem [shape: f32[2,8,1], index: 10, kind: input, shape index: {}]
  %s11 = inlined_call_operand.vmem [shape: bf16[2,64,32], index: 11, kind: input, shape index: {}]
  %s12 = inlined_call_operand.vmem [shape: f32[2,1,32], index: 12, kind: input, shape index: {}]
  %s13 = inlined_call_operand.hbm [shape: f32[16,32], index: 13, kind: output, shape index: {}]
  %s14 = sld [smem:[#allocation0]]
  $region89: #{tpu_custom_call.1} parent=0
    _
  %s16 = ssub.s32 1, %s14
  %s17 = scalar_select 0, %s16, %s14
  $region1: #{tpu_custom_call.1} parent=0
    #allocation2 [shape = 'u8[8192]{0}', space=vmem, size = 0x2000, scoped, tag = 'output window, operand 0, single buffered']
    #allocation3 [shape = 's32[2]{0}', space=sflag, size = 0x8, scoped, tag = 'scoped memory for tpu_custom_call.1']
    %18 = vsyncpa [#allocation3], 0
    loop: start=0, step=1, limit=4
    $region2: #{tpu_custom_call.1} parent=1 // loop_pre_header
      _
    $region3: #{tpu_custom_call.1} parent=1 // loop_header
      %s20 = sphi 0, %s24
      %p21 = scmp.ge.s32.totalorder %s20, 4
      %s27 = sphi 0, %s39
      %s28 = sphi 0, %s35
      %s29 = sphi 0, %s27
      %s30 = sphi 0, %s28
      %s31 = sphi 0, %s29
      %s32 = sphi 0, %s30
      %s42 = sphi 0, %s44
      %s45 = sphi 0, %s42
      %s46 = sphi 0, %s45
      %s62 = sphi 0, %s46
      %s68 = sphi 0, %s70
      %s71 = sphi 0, %s68
      %s72 = sphi 0, %s71
      %s88 = sphi 0, %s72
      %s94 = sphi 0, %s96
      %s97 = sphi 0, %s94
      %s98 = sphi 0, %s97
      %s114 = sphi 0, %s98
      %s120 = sphi 0, %s122
      %s123 = sphi 0, %s120
      %s124 = sphi 0, %s123
      %s140 = sphi 0, %s124
      %s146 = sphi 0, %s148
      %s149 = sphi 0, %s146
      %s150 = sphi 0, %s149
      %s166 = sphi 0, %s150
      %s172 = sphi 0, %s174
      %s175 = sphi 0, %s172
      %s176 = sphi 0, %s175
      %s192 = sphi 0, %s176
      %s198 = sphi 0, %s200
      %s201 = sphi 0, %s198
      %s202 = sphi 0, %s201
      %s218 = sphi 0, %s202
      %s224 = sphi 0, %s226
      %s227 = sphi 0, %s224
      %s228 = sphi 0, %s227
      %s244 = sphi 0, %s228
      %s250 = sphi 0, %s252
      %s253 = sphi 0, %s250
      %s254 = sphi 0, %s253
      %s270 = sphi 0, %s254
      %s276 = sphi 0, %s278
      %s279 = sphi 0, %s276
      %s280 = sphi 0, %s279
      %s296 = sphi 0, %s280
      %s302 = sphi 0, %s304
      %s305 = sphi 0, %s302
      %s306 = sphi 0, %s305
      %s322 = sphi 0, %s306
      %s328 = sphi 0, %s330
      %s331 = sphi 0, %s328
      %s332 = sphi 0, %s331
      %s348 = sphi 0, %s332
      %s354 = sphi 0, %s356
      %s357 = sphi 0, %s354
      %s358 = sphi 0, %s357
      %s374 = sphi 0, %s358
      %s380 = sphi 0, %s382
      %s383 = sphi 0, %s380
      %s384 = sphi 0, %s383
      %s400 = sphi 0, %s384
    $region4: #{tpu_custom_call.1} parent=1 // loop_header_branch
      %23 = sbr.rel (%p21) target = $region8
    $region5: #{tpu_custom_call.1} parent=1 // loop_body
      %s25 = ssub.s32 %s20, 1
      %s26 = ssub.s32 %s20, 2
      %s33 = sadd.s32 1, %s28
      %p34 = scmp.ge.s32.totalorder %s33, 2
      %s35 = scalar_select %p34, 0, %s33
      %s36 = sadd.s32 1, %s27
      %s37 = scalar_select %p34, %s36, %s27
      %p38 = scmp.ge.s32.totalorder %s37, 1
      %s39 = scalar_select %p38, 0, %s37
      %s40 = ssub.s32 %s27, %s39
      %p41 = scmp.eq.s32.totalorder %s40, 0
      %s43 = sadd.s32 %s42, 1
      %s44 = scalar_select %p41, %s42, %s43
      %p47 = pneg %p41
      %p48 = scmp.eq.s32.totalorder %s20, 1
      %p49 = por %p47, %p48
      %p50 = scmp.ne.s32.totalorder %s42, %s45
      %p51 = scmp.eq.s32.totalorder %s20, 0
      %p52 = por %p50, %p51
      %p53 = scmp.ne.s32.totalorder %s42, %s45
      %p54 = scmp.eq.s32.totalorder %s25, 1
      %p55 = por %p53, %p54
      %p56 = scmp.ne.s32.totalorder %s45, %s46
      %p57 = scmp.eq.s32.totalorder %s25, 0
      %p58 = por %p56, %p57
      %p59 = scmp.ne.s32.totalorder %s45, %s46
      %p60 = scmp.eq.s32.totalorder %s26, 1
      %p61 = por %p59, %p60
      %p63 = scmp.ne.s32.totalorder %s46, %s62
      %p64 = scmp.eq.s32.totalorder %s26, 0
      %p65 = por %p63, %p64
      %s66 = ssub.s32 %s28, %s35
      %p67 = scmp.eq.s32.totalorder %s66, 0
      %s69 = sadd.s32 %s68, 1
      %s70 = scalar_select %p67, %s68, %s69
      %p73 = pneg %p67
      %p74 = scmp.eq.s32.totalorder %s20, 1
      %p75 = por %p73, %p74
      %p76 = scmp.ne.s32.totalorder %s68, %s71
      %p77 = scmp.eq.s32.totalorder %s20, 0
      %p78 = por %p76, %p77
      %p79 = scmp.ne.s32.totalorder %s68, %s71
      %p80 = scmp.eq.s32.totalorder %s25, 1
      %p81 = por %p79, %p80
      %p82 = scmp.ne.s32.totalorder %s71, %s72
      %p83 = scmp.eq.s32.totalorder %s25, 0
      %p84 = por %p82, %p83
      %p85 = scmp.ne.s32.totalorder %s71, %s72
      %p86 = scmp.eq.s32.totalorder %s26, 1
      %p87 = por %p85, %p86
      %p89 = scmp.ne.s32.totalorder %s72, %s88
      %p90 = scmp.eq.s32.totalorder %s26, 0
      %p91 = por %p89, %p90
      %s92 = ssub.s32 %s28, %s35
      %p93 = scmp.eq.s32.totalorder %s92, 0
      %s95 = sadd.s32 %s94, 1
      %s96 = scalar_select %p93, %s94, %s95
      %p99 = pneg %p93
      %p100 = scmp.eq.s32.totalorder %s20, 1
      %p101 = por %p99, %p100
      %p102 = scmp.ne.s32.totalorder %s94, %s97
      %p103 = scmp.eq.s32.totalorder %s20, 0
      %p104 = por %p102, %p103
      %p105 = scmp.ne.s32.totalorder %s94, %s97
      %p106 = scmp.eq.s32.totalorder %s25, 1
      %p107 = por %p105, %p106
      %p108 = scmp.ne.s32.totalorder %s97, %s98
      %p109 = scmp.eq.s32.totalorder %s25, 0
      %p110 = por %p108, %p109
      %p111 = scmp.ne.s32.totalorder %s97, %s98
      %p112 = scmp.eq.s32.totalorder %s26, 1
      %p113 = por %p111, %p112
      %p115 = scmp.ne.s32.totalorder %s98, %s114
      %p116 = scmp.eq.s32.totalorder %s26, 0
      %p117 = por %p115, %p116
      %s118 = ssub.s32 %s28, %s35
      %p119 = scmp.eq.s32.totalorder %s118, 0
      %s121 = sadd.s32 %s120, 1
      %s122 = scalar_select %p119, %s120, %s121
      %p125 = pneg %p119
      %p126 = scmp.eq.s32.totalorder %s20, 1
      %p127 = por %p125, %p126
      %p128 = scmp.ne.s32.totalorder %s120, %s123
      %p129 = scmp.eq.s32.totalorder %s20, 0
      %p130 = por %p128, %p129
      %p131 = scmp.ne.s32.totalorder %s120, %s123
      %p132 = scmp.eq.s32.totalorder %s25, 1
      %p133 = por %p131, %p132
      %p134 = scmp.ne.s32.totalorder %s123, %s124
      %p135 = scmp.eq.s32.totalorder %s25, 0
      %p136 = por %p134, %p135
      %p137 = scmp.ne.s32.totalorder %s123, %s124
      %p138 = scmp.eq.s32.totalorder %s26, 1
      %p139 = por %p137, %p138
      %p141 = scmp.ne.s32.totalorder %s124, %s140
      %p142 = scmp.eq.s32.totalorder %s26, 0
      %p143 = por %p141, %p142
      %s144 = ssub.s32 %s28, %s35
      %p145 = scmp.eq.s32.totalorder %s144, 0
      %s147 = sadd.s32 %s146, 1
      %s148 = scalar_select %p145, %s146, %s147
      %p151 = pneg %p145
      %p152 = scmp.eq.s32.totalorder %s20, 1
      %p153 = por %p151, %p152
      %p154 = scmp.ne.s32.totalorder %s146, %s149
      %p155 = scmp.eq.s32.totalorder %s20, 0
      %p156 = por %p154, %p155
      %p157 = scmp.ne.s32.totalorder %s146, %s149
      %p158 = scmp.eq.s32.totalorder %s25, 1
      %p159 = por %p157, %p158
      %p160 = scmp.ne.s32.totalorder %s149, %s150
      %p161 = scmp.eq.s32.totalorder %s25, 0
      %p162 = por %p160, %p161
      %p163 = scmp.ne.s32.totalorder %s149, %s150
      %p164 = scmp.eq.s32.totalorder %s26, 1
      %p165 = por %p163, %p164
      %p167 = scmp.ne.s32.totalorder %s150, %s166
      %p168 = scmp.eq.s32.totalorder %s26, 0
      %p169 = por %p167, %p168
      %s170 = ssub.s32 %s28, %s35
      %p171 = scmp.eq.s32.totalorder %s170, 0
      %s173 = sadd.s32 %s172, 1
      %s174 = scalar_select %p171, %s172, %s173
      %p177 = pneg %p171
      %p178 = scmp.eq.s32.totalorder %s20, 1
      %p179 = por %p177, %p178
      %p180 = scmp.ne.s32.totalorder %s172, %s175
      %p181 = scmp.eq.s32.totalorder %s20, 0
      %p182 = por %p180, %p181
      %p183 = scmp.ne.s32.totalorder %s172, %s175
      %p184 = scmp.eq.s32.totalorder %s25, 1
      %p185 = por %p183, %p184
      %p186 = scmp.ne.s32.totalorder %s175, %s176
      %p187 = scmp.eq.s32.totalorder %s25, 0
      %p188 = por %p186, %p187
      %p189 = scmp.ne.s32.totalorder %s175, %s176
      %p190 = scmp.eq.s32.totalorder %s26, 1
      %p191 = por %p189, %p190
      %p193 = scmp.ne.s32.totalorder %s176, %s192
      %p194 = scmp.eq.s32.totalorder %s26, 0
      %p195 = por %p193, %p194
      %s196 = ssub.s32 %s28, %s35
      %p197 = scmp.eq.s32.totalorder %s196, 0
      %s199 = sadd.s32 %s198, 1
      %s200 = scalar_select %p197, %s198, %s199
      %p203 = pneg %p197
      %p204 = scmp.eq.s32.totalorder %s20, 1
      %p205 = por %p203, %p204
      %p206 = scmp.ne.s32.totalorder %s198, %s201
      %p207 = scmp.eq.s32.totalorder %s20, 0
      %p208 = por %p206, %p207
      %p209 = scmp.ne.s32.totalorder %s198, %s201
      %p210 = scmp.eq.s32.totalorder %s25, 1
      %p211 = por %p209, %p210
      %p212 = scmp.ne.s32.totalorder %s201, %s202
      %p213 = scmp.eq.s32.totalorder %s25, 0
      %p214 = por %p212, %p213
      %p215 = scmp.ne.s32.totalorder %s201, %s202
      %p216 = scmp.eq.s32.totalorder %s26, 1
      %p217 = por %p215, %p216
      %p219 = scmp.ne.s32.totalorder %s202, %s218
      %p220 = scmp.eq.s32.totalorder %s26, 0
      %p221 = por %p219, %p220
      %s222 = ssub.s32 %s28, %s35
      %p223 = scmp.eq.s32.totalorder %s222, 0
      %s225 = sadd.s32 %s224, 1
      %s226 = scalar_select %p223, %s224, %s225
      %p229 = pneg %p223
      %p230 = scmp.eq.s32.totalorder %s20, 1
      %p231 = por %p229, %p230
      %p232 = scmp.ne.s32.totalorder %s224, %s227
      %p233 = scmp.eq.s32.totalorder %s20, 0
      %p234 = por %p232, %p233
      %p235 = scmp.ne.s32.totalorder %s224, %s227
      %p236 = scmp.eq.s32.totalorder %s25, 1
      %p237 = por %p235, %p236
      %p238 = scmp.ne.s32.totalorder %s227, %s228
      %p239 = scmp.eq.s32.totalorder %s25, 0
      %p240 = por %p238, %p239
      %p241 = scmp.ne.s32.totalorder %s227, %s228
      %p242 = scmp.eq.s32.totalorder %s26, 1
      %p243 = por %p241, %p242
      %p245 = scmp.ne.s32.totalorder %s228, %s244
      %p246 = scmp.eq.s32.totalorder %s26, 0
      %p247 = por %p245, %p246
      %s248 = ssub.s32 %s28, %s35
      %p249 = scmp.eq.s32.totalorder %s248, 0
      %s251 = sadd.s32 %s250, 1
      %s252 = scalar_select %p249, %s250, %s251
      %p255 = pneg %p249
      %p256 = scmp.eq.s32.totalorder %s20, 1
      %p257 = por %p255, %p256
      %p258 = scmp.ne.s32.totalorder %s250, %s253
      %p259 = scmp.eq.s32.totalorder %s20, 0
      %p260 = por %p258, %p259
      %p261 = scmp.ne.s32.totalorder %s250, %s253
      %p262 = scmp.eq.s32.totalorder %s25, 1
      %p263 = por %p261, %p262
      %p264 = scmp.ne.s32.totalorder %s253, %s254
      %p265 = scmp.eq.s32.totalorder %s25, 0
      %p266 = por %p264, %p265
      %p267 = scmp.ne.s32.totalorder %s253, %s254
      %p268 = scmp.eq.s32.totalorder %s26, 1
      %p269 = por %p267, %p268
      %p271 = scmp.ne.s32.totalorder %s254, %s270
      %p272 = scmp.eq.s32.totalorder %s26, 0
      %p273 = por %p271, %p272
      %s274 = ssub.s32 %s28, %s35
      %p275 = scmp.eq.s32.totalorder %s274, 0
      %s277 = sadd.s32 %s276, 1
      %s278 = scalar_select %p275, %s276, %s277
      %p281 = pneg %p275
      %p282 = scmp.eq.s32.totalorder %s20, 1
      %p283 = por %p281, %p282
      %p284 = scmp.ne.s32.totalorder %s276, %s279
      %p285 = scmp.eq.s32.totalorder %s20, 0
      %p286 = por %p284, %p285
      %p287 = scmp.ne.s32.totalorder %s276, %s279
      %p288 = scmp.eq.s32.totalorder %s25, 1
      %p289 = por %p287, %p288
      %p290 = scmp.ne.s32.totalorder %s279, %s280
      %p291 = scmp.eq.s32.totalorder %s25, 0
      %p292 = por %p290, %p291
      %p293 = scmp.ne.s32.totalorder %s279, %s280
      %p294 = scmp.eq.s32.totalorder %s26, 1
      %p295 = por %p293, %p294
      %p297 = scmp.ne.s32.totalorder %s280, %s296
      %p298 = scmp.eq.s32.totalorder %s26, 0
      %p299 = por %p297, %p298
      %s300 = ssub.s32 %s28, %s35
      %p301 = scmp.eq.s32.totalorder %s300, 0
      %s303 = sadd.s32 %s302, 1
      %s304 = scalar_select %p301, %s302, %s303
      %p307 = pneg %p301
      %p308 = scmp.eq.s32.totalorder %s20, 1
      %p309 = por %p307, %p308
      %p310 = scmp.ne.s32.totalorder %s302, %s305
      %p311 = scmp.eq.s32.totalorder %s20, 0
      %p312 = por %p310, %p311
      %p313 = scmp.ne.s32.totalorder %s302, %s305
      %p314 = scmp.eq.s32.totalorder %s25, 1
      %p315 = por %p313, %p314
      %p316 = scmp.ne.s32.totalorder %s305, %s306
      %p317 = scmp.eq.s32.totalorder %s25, 0
      %p318 = por %p316, %p317
      %p319 = scmp.ne.s32.totalorder %s305, %s306
      %p320 = scmp.eq.s32.totalorder %s26, 1
      %p321 = por %p319, %p320
      %p323 = scmp.ne.s32.totalorder %s306, %s322
      %p324 = scmp.eq.s32.totalorder %s26, 0
      %p325 = por %p323, %p324
      %s326 = ssub.s32 %s28, %s35
      %p327 = scmp.eq.s32.totalorder %s326, 0
      %s329 = sadd.s32 %s328, 1
      %s330 = scalar_select %p327, %s328, %s329
      %p333 = pneg %p327
      %p334 = scmp.eq.s32.totalorder %s20, 1
      %p335 = por %p333, %p334
      %p336 = scmp.ne.s32.totalorder %s328, %s331
      %p337 = scmp.eq.s32.totalorder %s20, 0
      %p338 = por %p336, %p337
      %p339 = scmp.ne.s32.totalorder %s328, %s331
      %p340 = scmp.eq.s32.totalorder %s25, 1
      %p341 = por %p339, %p340
      %p342 = scmp.ne.s32.totalorder %s331, %s332
      %p343 = scmp.eq.s32.totalorder %s25, 0
      %p344 = por %p342, %p343
      %p345 = scmp.ne.s32.totalorder %s331, %s332
      %p346 = scmp.eq.s32.totalorder %s26, 1
      %p347 = por %p345, %p346
      %p349 = scmp.ne.s32.totalorder %s332, %s348
      %p350 = scmp.eq.s32.totalorder %s26, 0
      %p351 = por %p349, %p350
      %s352 = ssub.s32 %s28, %s35
      %p353 = scmp.eq.s32.totalorder %s352, 0
      %s355 = sadd.s32 %s354, 1
      %s356 = scalar_select %p353, %s354, %s355
      %p359 = pneg %p353
      %p360 = scmp.eq.s32.totalorder %s20, 1
      %p361 = por %p359, %p360
      %p362 = scmp.ne.s32.totalorder %s354, %s357
      %p363 = scmp.eq.s32.totalorder %s20, 0
      %p364 = por %p362, %p363
      %p365 = scmp.ne.s32.totalorder %s354, %s357
      %p366 = scmp.eq.s32.totalorder %s25, 1
      %p367 = por %p365, %p366
      %p368 = scmp.ne.s32.totalorder %s357, %s358
      %p369 = scmp.eq.s32.totalorder %s25, 0
      %p370 = por %p368, %p369
      %p371 = scmp.ne.s32.totalorder %s357, %s358
      %p372 = scmp.eq.s32.totalorder %s26, 1
      %p373 = por %p371, %p372
      %p375 = scmp.ne.s32.totalorder %s358, %s374
      %p376 = scmp.eq.s32.totalorder %s26, 0
      %p377 = por %p375, %p376
      %s378 = ssub.s32 %s27, %s39
      %p379 = scmp.eq.s32.totalorder %s378, 0
      %s381 = sadd.s32 %s380, 1
      %s382 = scalar_select %p379, %s380, %s381
      %p385 = pneg %p379
      %p386 = scmp.eq.s32.totalorder %s20, 1
      %p387 = por %p385, %p386
      %p388 = scmp.ne.s32.totalorder %s380, %s383
      %p389 = scmp.eq.s32.totalorder %s20, 0
      %p390 = por %p388, %p389
      %p391 = scmp.ne.s32.totalorder %s380, %s383
      %p392 = scmp.eq.s32.totalorder %s25, 1
      %p393 = por %p391, %p392
      %p394 = scmp.ne.s32.totalorder %s383, %s384
      %p395 = scmp.eq.s32.totalorder %s25, 0
      %p396 = por %p394, %p395
      %p397 = scmp.ne.s32.totalorder %s383, %s384
      %p398 = scmp.eq.s32.totalorder %s26, 1
      %p399 = por %p397, %p398
      %p401 = scmp.ne.s32.totalorder %s384, %s400
      %p402 = scmp.eq.s32.totalorder %s26, 0
      %p403 = por %p401, %p402
      %p404 = scmp.le.s32.totalorder 1, %s20
      %p405 = scmp.lt.s32.totalorder %s20, 3
      %p406 = pnand %p404, %p405
      %p407 = pneg %p406
      // Predicated region
      $region9: #{tpu_custom_call.1} parent=5 // pred_check
        _
      $region10: #{tpu_custom_call.1} parent=5 // pred_check_branch
        %409 = sbr.rel (%p406) target = $region12
      $region11: #{tpu_custom_call.1} parent=5 // pred_region
        %s410 = ssub.s32 %s20, 1
        // Predicated region
        $region13: #{tpu_custom_call.1} parent=11 // pred_check
          %p411 = pneg %p58
        $region14: #{tpu_custom_call.1} parent=11 // pred_check_branch
          %413 = sbr.rel (%p411) target = $region16
        $region15: #{tpu_custom_call.1} parent=11 // pred_region
          %s414 = smul.u32 2, %s29
          %p415 = scmp.lt.s32.totalorder %s414, 1
          %s416 = scalar_select %p415, %s414, 1
          %s417 = smul.addr %s416, 8
          %s418 = scalar_lea.vmem %s0, %s417
          %s419 = smul.u32 2, %s29
        $region16: #{tpu_custom_call.1} parent=11 // pred_fallthru
          _
      $region12: #{tpu_custom_call.1} parent=5 // pred_fallthru
        _
      %p420 = scmp.lt.s32.totalorder %s20, 2
      // Predicated region
      $region17: #{tpu_custom_call.1} parent=5 // pred_check
        %p421 = pneg %p420
      $region18: #{tpu_custom_call.1} parent=5 // pred_check_branch
        %423 = sbr.rel (%p421) target = $region20
      $region19: #{tpu_custom_call.1} parent=5 // pred_region
        // Predicated region
        $region21: #{tpu_custom_call.1} parent=19 // pred_check
          %p424 = pneg %p78
        $region22: #{tpu_custom_call.1} parent=19 // pred_check_branch
          %426 = sbr.rel (%p424) target = $region24
        $region23: #{tpu_custom_call.1} parent=19 // pred_region
          %p427 = scmp.lt.s32.totalorder %s28, 1
          %s428 = scalar_select %p427, %s28, 1
          %s429 = scalar_lea.vmem %s1, %s428
        $region24: #{tpu_custom_call.1} parent=19 // pred_fallthru
          _
        // Predicated region
        $region25: #{tpu_custom_call.1} parent=19 // pred_check
          %p430 = pneg %p104
        $region26: #{tpu_custom_call.1} parent=19 // pred_check_branch
          %432 = sbr.rel (%p430) target = $region28
        $region27: #{tpu_custom_call.1} parent=19 // pred_region
          %p433 = scmp.lt.s32.totalorder %s28, 1
          %s434 = scalar_select %p433, %s28, 1
          %s435 = scalar_lea.vmem %s2, %s434
        $region28: #{tpu_custom_call.1} parent=19 // pred_fallthru
          _
        // Predicated region
        $region29: #{tpu_custom_call.1} parent=19 // pred_check
          %p436 = pneg %p130
        $region30: #{tpu_custom_call.1} parent=19 // pred_check_branch
          %438 = sbr.rel (%p436) target = $region32
        $region31: #{tpu_custom_call.1} parent=19 // pred_region
          %p439 = scmp.lt.s32.totalorder %s28, 1
          %s440 = scalar_select %p439, %s28, 1
          %s441 = smul.addr %s440, 4
          %s442 = smul.addr %s441, 4
          %s443 = scalar_lea.vmem %s3, %s442
        $region32: #{tpu_custom_call.1} parent=19 // pred_fallthru
          _
        // Predicated region
        $region33: #{tpu_custom_call.1} parent=19 // pred_check
          %p444 = pneg %p156
        $region34: #{tpu_custom_call.1} parent=19 // pred_check_branch
          %446 = sbr.rel (%p444) target = $region36
        $region35: #{tpu_custom_call.1} parent=19 // pred_region
          %p447 = scmp.lt.s32.totalorder %s28, 1
          %s448 = scalar_select %p447, %s28, 1
          %s449 = scalar_lea.vmem %s4, %s448
        $region36: #{tpu_custom_call.1} parent=19 // pred_fallthru
          _
        // Predicated region
        $region37: #{tpu_custom_call.1} parent=19 // pred_check
          %p450 = pneg %p182
        $region38: #{tpu_custom_call.1} parent=19 // pred_check_branch
          %452 = sbr.rel (%p450) target = $region40
        $region39: #{tpu_custom_call.1} parent=19 // pred_region
          %p453 = scmp.lt.s32.totalorder %s28, 1
          %s454 = scalar_select %p453, %s28, 1
          %s455 = smul.addr %s454, 4
          %s456 = smul.addr %s455, 4
          %s457 = scalar_lea.vmem %s5, %s456
        $region40: #{tpu_custom_call.1} parent=19 // pred_fallthru
          _
        // Predicated region
        $region41: #{tpu_custom_call.1} parent=19 // pred_check
          %p458 = pneg %p208
        $region42: #{tpu_custom_call.1} parent=19 // pred_check_branch
          %460 = sbr.rel (%p458) target = $region44
        $region43: #{tpu_custom_call.1} parent=19 // pred_region
          %p461 = scmp.lt.s32.totalorder %s28, 1
          %s462 = scalar_select %p461, %s28, 1
          %s463 = scalar_lea.vmem %s6, %s462
        $region44: #{tpu_custom_call.1} parent=19 // pred_fallthru
          _
        // Predicated region
        $region45: #{tpu_custom_call.1} parent=19 // pred_check
          %p464 = pneg %p234
        $region46: #{tpu_custom_call.1} parent=19 // pred_check_branch
          %466 = sbr.rel (%p464) target = $region48
        $region47: #{tpu_custom_call.1} parent=19 // pred_region
          %p467 = scmp.lt.s32.totalorder %s28, 1
          %s468 = scalar_select %p467, %s28, 1
          %s469 = scalar_lea.vmem %s7, %s468
        $region48: #{tpu_custom_call.1} parent=19 // pred_fallthru
          _
        // Predicated region
        $region49: #{tpu_custom_call.1} parent=19 // pred_check
          %p470 = pneg %p260
        $region50: #{tpu_custom_call.1} parent=19 // pred_check_branch
          %472 = sbr.rel (%p470) target = $region52
        $region51: #{tpu_custom_call.1} parent=19 // pred_region
          %p473 = scmp.lt.s32.totalorder %s28, 1
          %s474 = scalar_select %p473, %s28, 1
          %s475 = scalar_lea.vmem %s8, %s474
        $region52: #{tpu_custom_call.1} parent=19 // pred_fallthru
          _
        // Predicated region
        $region53: #{tpu_custom_call.1} parent=19 // pred_check
          %p476 = pneg %p286
        $region54: #{tpu_custom_call.1} parent=19 // pred_check_branch
          %478 = sbr.rel (%p476) target = $region56
        $region55: #{tpu_custom_call.1} parent=19 // pred_region
          %p479 = scmp.lt.s32.totalorder %s28, 1
          %s480 = scalar_select %p479, %s28, 1
          %s481 = smul.addr %s480, 4
          %s482 = scalar_lea.vmem %s9, %s481
        $region56: #{tpu_custom_call.1} parent=19 // pred_fallthru
          _
        // Predicated region
        $region57: #{tpu_custom_call.1} parent=19 // pred_check
          %p483 = pneg %p312
        $region58: #{tpu_custom_call.1} parent=19 // pred_check_branch
          %485 = sbr.rel (%p483) target = $region60
        $region59: #{tpu_custom_call.1} parent=19 // pred_region
          %p486 = scmp.lt.s32.totalorder %s28, 1
          %s487 = scalar_select %p486, %s28, 1
          %s488 = smul.addr %s487, 8
          %s489 = scalar_lea.vmem %s10, %s488
        $region60: #{tpu_custom_call.1} parent=19 // pred_fallthru
          _
        // Predicated region
        $region61: #{tpu_custom_call.1} parent=19 // pred_check
          %p490 = pneg %p338
        $region62: #{tpu_custom_call.1} parent=19 // pred_check_branch
          %492 = sbr.rel (%p490) target = $region64
        $region63: #{tpu_custom_call.1} parent=19 // pred_region
          %p493 = scmp.lt.s32.totalorder %s28, 1
          %s494 = scalar_select %p493, %s28, 1
          %s495 = smul.addr %s494, 8
          %s496 = smul.addr %s495, 4
          %s497 = scalar_lea.vmem %s11, %s496
        $region64: #{tpu_custom_call.1} parent=19 // pred_fallthru
          _
        // Predicated region
        $region65: #{tpu_custom_call.1} parent=19 // pred_check
          %p498 = pneg %p364
        $region66: #{tpu_custom_call.1} parent=19 // pred_check_branch
          %500 = sbr.rel (%p498) target = $region68
        $region67: #{tpu_custom_call.1} parent=19 // pred_region
          %p501 = scmp.lt.s32.totalorder %s28, 1
          %s502 = scalar_select %p501, %s28, 1
          %s503 = scalar_lea.vmem %s12, %s502
        $region68: #{tpu_custom_call.1} parent=19 // pred_fallthru
          _
      $region20: #{tpu_custom_call.1} parent=5 // pred_fallthru
        _
      %p504 = scmp.le.s32.totalorder 1, %s20
      %p505 = scmp.lt.s32.totalorder %s20, 3
      %p506 = pnand %p504, %p505
      %p507 = pneg %p506
      // Predicated region
      $region69: #{tpu_custom_call.1} parent=5 // pred_check
        _
      $region70: #{tpu_custom_call.1} parent=5 // pred_check_branch
        %509 = sbr.rel (%p506) target = $region72
      $region71: #{tpu_custom_call.1} parent=5 // pred_region
        %s510 = ssub.s32 %s20, 1
        %s511 = smul.u32 2, %s29
        %p512 = scmp.lt.s32.totalorder %s511, 1
        %s513 = scalar_select %p512, %s511, 1
        %s514 = smul.addr %s513, 8
        %s515 = scalar_lea.vmem %s0, %s514
        %p516 = pneg %p58
        %p517 = pneg %p55
        %p518 = scmp.lt.s32.totalorder %s30, 1
        %s519 = scalar_select %p518, %s30, 1
        %s520 = scalar_lea.vmem %s1, %s519
        %p521 = pneg %p84
        %p522 = pneg %p81
        %p523 = scmp.lt.s32.totalorder %s30, 1
        %s524 = scalar_select %p523, %s30, 1
        %s525 = scalar_lea.vmem %s2, %s524
        %p526 = pneg %p110
        %p527 = pneg %p107
        %p528 = scmp.lt.s32.totalorder %s30, 1
        %s529 = scalar_select %p528, %s30, 1
        %s530 = smul.addr %s529, 4
        %s531 = smul.addr %s530, 4
        %s532 = scalar_lea.vmem %s3, %s531
        %p533 = pneg %p136
        %p534 = pneg %p133
        %p535 = scmp.lt.s32.totalorder %s30, 1
        %s536 = scalar_select %p535, %s30, 1
        %s537 = scalar_lea.vmem %s4, %s536
        %p538 = pneg %p162
        %p539 = pneg %p159
        %p540 = scmp.lt.s32.totalorder %s30, 1
        %s541 = scalar_select %p540, %s30, 1
        %s542 = smul.addr %s541, 4
        %s543 = smul.addr %s542, 4
        %s544 = scalar_lea.vmem %s5, %s543
        %p545 = pneg %p188
        %p546 = pneg %p185
        %p547 = scmp.lt.s32.totalorder %s30, 1
        %s548 = scalar_select %p547, %s30, 1
        %s549 = scalar_lea.vmem %s6, %s548
        %p550 = pneg %p214
        %p551 = pneg %p211
        %p552 = scmp.lt.s32.totalorder %s30, 1
        %s553 = scalar_select %p552, %s30, 1
        %s554 = scalar_lea.vmem %s7, %s553
        %p555 = pneg %p240
        %p556 = pneg %p237
        %p557 = scmp.lt.s32.totalorder %s30, 1
        %s558 = scalar_select %p557, %s30, 1
        %s559 = scalar_lea.vmem %s8, %s558
        %p560 = pneg %p266
        %p561 = pneg %p263
        %p562 = scmp.lt.s32.totalorder %s30, 1
        %s563 = scalar_select %p562, %s30, 1
        %s564 = smul.addr %s563, 4
        %s565 = scalar_lea.vmem %s9, %s564
        %p566 = pneg %p292
        %p567 = pneg %p289
        %p568 = scmp.lt.s32.totalorder %s30, 1
        %s569 = scalar_select %p568, %s30, 1
        %s570 = smul.addr %s569, 8
        %s571 = scalar_lea.vmem %s10, %s570
        %p572 = pneg %p318
        %p573 = pneg %p315
        %p574 = scmp.lt.s32.totalorder %s30, 1
        %s575 = scalar_select %p574, %s30, 1
        %s576 = smul.addr %s575, 8
        %s577 = smul.addr %s576, 4
        %s578 = scalar_lea.vmem %s11, %s577
        %p579 = pneg %p344
        %p580 = pneg %p341
        %p581 = scmp.lt.s32.totalorder %s30, 1
        %s582 = scalar_select %p581, %s30, 1
        %s583 = scalar_lea.vmem %s12, %s582
        %p584 = pneg %p370
        %p585 = pneg %p367
        %p586 = pneg %p396
        %p587 = pneg %p393
        %s588 = smul.u32 2, %s29
        %p589 = scmp.lt.s32.totalorder %s588, 1
        %s590 = scalar_select %p589, %s588, 1
        %s591 = smul.addr %s590, 8
        %s592 = scalar_lea.vmem %s0, %s591
        %s593 = smul.u32 2, %s29
        %p594 = scmp.lt.s32.totalorder %s30, 1
        %s595 = scalar_select %p594, %s30, 1
        %s596 = scalar_lea.vmem %s1, %s595
        %p597 = scmp.lt.s32.totalorder %s30, 1
        %s598 = scalar_select %p597, %s30, 1
        %s599 = scalar_lea.vmem %s2, %s598
        %p600 = scmp.lt.s32.totalorder %s30, 1
        %s601 = scalar_select %p600, %s30, 1
        %s602 = smul.addr %s601, 4
        %s603 = smul.addr %s602, 4
        %s604 = scalar_lea.vmem %s3, %s603
        %p605 = scmp.lt.s32.totalorder %s30, 1
        %s606 = scalar_select %p605, %s30, 1
        %s607 = scalar_lea.vmem %s4, %s606
        %p608 = scmp.lt.s32.totalorder %s30, 1
        %s609 = scalar_select %p608, %s30, 1
        %s610 = smul.addr %s609, 4
        %s611 = smul.addr %s610, 4
        %s612 = scalar_lea.vmem %s5, %s611
        %p613 = scmp.lt.s32.totalorder %s30, 1
        %s614 = scalar_select %p613, %s30, 1
        %s615 = scalar_lea.vmem %s6, %s614
        %p616 = scmp.lt.s32.totalorder %s30, 1
        %s617 = scalar_select %p616, %s30, 1
        %s618 = scalar_lea.vmem %s7, %s617
        %p619 = scmp.lt.s32.totalorder %s30, 1
        %s620 = scalar_select %p619, %s30, 1
        %s621 = scalar_lea.vmem %s8, %s620
        %p622 = scmp.lt.s32.totalorder %s30, 1
        %s623 = scalar_select %p622, %s30, 1
        %s624 = smul.addr %s623, 4
        %s625 = scalar_lea.vmem %s9, %s624
        %p626 = scmp.lt.s32.totalorder %s30, 1
        %s627 = scalar_select %p626, %s30, 1
        %s628 = smul.addr %s627, 8
        %s629 = scalar_lea.vmem %s10, %s628
        %p630 = scmp.lt.s32.totalorder %s30, 1
        %s631 = scalar_select %p630, %s30, 1
        %s632 = smul.addr %s631, 8
        %s633 = smul.addr %s632, 4
        %s634 = scalar_lea.vmem %s11, %s633
        %p635 = scmp.lt.s32.totalorder %s30, 1
        %s636 = scalar_select %p635, %s30, 1
        %s637 = scalar_lea.vmem %s12, %s636
        %s638 = smul.u32 2, %s29
        %p640 = scmp.eq.s32.totalorder %s30, 0
        // Predicated region
        $region73: #{tpu_custom_call.1} parent=71 // pred_check
          %p641 = pneg %p640
        $region74: #{tpu_custom_call.1} parent=71 // pred_check_branch
          %643 = sbr.rel (%p641) target = $region76
        $region75: #{tpu_custom_call.1} parent=71 // pred_region
          %v644 = vld [vmem:[%s592] sm:$0xff]
          %v645 = vld [vmem:[%s592 + $0x8] sm:$0xff]
          %vm646 = vcmask 261120
          %647 = vst.msk [vmem:[#allocation2] sm:$0xff] %vm646, %v644
          %648 = vst.msk [vmem:[#allocation2 + $0x8] sm:$0xff] %vm646, %v645
        $region76: #{tpu_custom_call.1} parent=71 // pred_fallthru
          _
        %v649 = vld [vmem:[#allocation2] sm:$0xff]
        %v650 = vld [vmem:[#allocation2 + $0x8] sm:$0xff]
        %v651 = vld [vmem:[%s596] sm:$0x1]
        %v652 = vld [vmem:[%s599] sm:$0x1]
        %vm653 = vcmask 261120
        %v654 = vsel %vm653, %v649, 0.0
        %655 = vadd.xlane.f32.xlu0 %v654
        %v656 = vpop.xlane.xlu0 %655
        %v657 = vsel %vm653, %v650, 0.0
        %658 = vadd.xlane.f32.xlu0 %v657
        %v659 = vpop.xlane.xlu0 %658
        %v660 = vrcp.pop 32.0
        %v661 = vmul.f32 %v656, %v660
        %v662 = vmul.f32 %v659, %v660
        %v663 = vsub.f32 %v649, %v661
        %v664 = vsub.f32 %v650, %v662
        %v665 = vmul.f32 %v663, %v663
        %v666 = vmul.f32 %v664, %v664
        %v667 = vsel %vm653, %v665, 0.0
        %668 = vadd.xlane.f32.xlu0 %v667
        %v669 = vpop.xlane.xlu0 %668
        %v670 = vsel %vm653, %v666, 0.0
        %671 = vadd.xlane.f32.xlu0 %v670
        %v672 = vpop.xlane.xlu0 %671
        %v673 = vmul.f32 %v669, %v660
        %v674 = vmul.f32 %v672, %v660
        %v675 = vadd.f32 %v673, 1e-05
        %v676 = vadd.f32 %v674, 1e-05
        %v677 = vrsqrt.pop %v675
        %v678 = vrsqrt.pop %v676
        %v679 = vmul.f32 %v663, %v677
        %v680 = vmul.f32 %v664, %v678
        %v682 = vlaneseq
        %v683 = vshrl.u32 %v682, 7
        %v684 = vsub.s32 0, %v683
        %v685 = vrot.slane %v651, %v684
        %v687 = vmul.f32 %v679, %v685
        %v688 = vmul.f32 %v680, %v685
        %v690 = vlaneseq
        %v691 = vshrl.u32 %v690, 7
        %v692 = vsub.s32 0, %v691
        %v693 = vrot.slane %v652, %v692
        %v695 = vadd.f32 %v687, %v693
        %v696 = vadd.f32 %v688, %v693
        %v697 = vpack.c.bf16 %v696, %v695
        %v698 = vld [vmem:[%s604] sm:$0xf]
        %v699 = vld [vmem:[%s604 + $0x4] sm:$0xf]
        %v700 = vld [vmem:[%s604 + $0x8] sm:$0xf]
        %v701 = vld [vmem:[%s604 + $0xc] sm:$0xf]
        %v702 = vld [vmem:[%s607] sm:$0x1]
        %v704 = vlaneseq
        %v705 = vshrl.u32 %v704, 7
        %v706 = vsub.s32 0, %v705
        %v707 = vrot.slane %v702, %v706
        %v713 = vunpack.c.l.b16 %v698
        %v714 = vunpack.c.l.b16 %v699
        %v715 = vunpack.c.l.b16 %v700
        %v716 = vunpack.c.l.b16 %v701
        %v717 = vpack.c.b16 %v714, %v713
        %v718 = vpack.c.b16 %v716, %v715
        %v722 = vsel %vm653, %v697, 0
        %724 = vmatprep.subr.bf16.mxu0 0
        %725 = vmatpush1.bf16.msra.mxu0 %v717
        %726 = vmatprep.subr.bf16.mxu0 0
        %727 = vmatpush1.bf16.msra.mxu0 %v718
        %728 = vmatprep.subr.bf16.mxu0 0
        %729 = vmatpush1.bf16.msra.mxu0 0
        %730 = vmatprep.subr.bf16.mxu0 0
        %731 = vmatpush1.bf16.msra.mxu0 0
        %732 = vmatprep.subr.bf16.mxu0 0
        %733 = vmatpush1.bf16.msra.mxu0 0
        %734 = vmatprep.subr.bf16.mxu0 0
        %735 = vmatpush1.bf16.msra.mxu0 0
        %736 = vmatprep.subr.bf16.mxu0 0
        %737 = vmatpush1.bf16.msra.mxu0 0
        %738 = vmatprep.subr.bf16.mxu0 0
        %739 = vmatpush1.bf16.msra.mxu0 0
        %740 = vmatprep.subr.bf16.mxu0 0
        %741 = vmatpush1.bf16.msra.mxu0 0
        %742 = vmatprep.subr.bf16.mxu0 0
        %743 = vmatpush1.bf16.msra.mxu0 0
        %744 = vmatprep.subr.bf16.mxu0 0
        %745 = vmatpush1.bf16.msra.mxu0 0
        %746 = vmatprep.subr.bf16.mxu0 0
        %747 = vmatpush1.bf16.msra.mxu0 0
        %748 = vmatprep.subr.bf16.mxu0 0
        %749 = vmatpush1.bf16.msra.mxu0 0
        %750 = vmatprep.subr.bf16.mxu0 0
        %751 = vmatpush1.bf16.msra.mxu0 0
        %752 = vmatprep.subr.bf16.mxu0 0
        %753 = vmatpush1.bf16.msra.mxu0 0
        %754 = vmatprep.subr.bf16.mxu0 0
        %755 = vmatpush1.bf16.msra.mxu0 0
        %756 = vmatprep.mubr.bf16.mxu0 0
        %757 = vmatmul.mubr.bf16.gmra.mrb[0].mxu0 %v722
        %v758 = vpop.f32.mrb[0].mxu0
        %v759 = vadd.f32 %v707, %v758
        %v760 = vpop.f32.mrb[0].mxu0
        %v761 = vpop.f32.mrb[0].mxu0
        %v762 = vadd.f32 %v707, %v761
        %v763 = vpop.f32.mrb[0].mxu0
        %764 = vdwg.mxu0
        %v765 = vld [vmem:[%s612] sm:$0xf]
        %v766 = vld [vmem:[%s612 + $0x4] sm:$0xf]
        %v767 = vld [vmem:[%s612 + $0x8] sm:$0xf]
        %v768 = vld [vmem:[%s612 + $0xc] sm:$0xf]
        %v769 = vld [vmem:[%s615] sm:$0x1]
        %v771 = vlaneseq
        %v772 = vshrl.u32 %v771, 7
        %v773 = vsub.s32 0, %v772
        %v774 = vrot.slane %v769, %v773
        %v780 = vunpack.c.l.b16 %v765
        %v781 = vunpack.c.l.b16 %v766
        %v782 = vunpack.c.l.b16 %v767
        %v783 = vunpack.c.l.b16 %v768
        %v784 = vpack.c.b16 %v781, %v780
        %v785 = vpack.c.b16 %v783, %v782
        %788 = vmatprep.subr.bf16.mxu0 0
        %789 = vmatpush1.bf16.msra.mxu0 %v784
        %790 = vmatprep.subr.bf16.mxu0 0
        %791 = vmatpush1.bf16.msra.mxu0 %v785
        %792 = vmatprep.subr.bf16.mxu0 0
        %793 = vmatpush1.bf16.msra.mxu0 0
        %794 = vmatprep.subr.bf16.mxu0 0
        %795 = vmatpush1.bf16.msra.mxu0 0
        %796 = vmatprep.subr.bf16.mxu0 0
        %797 = vmatpush1.bf16.msra.mxu0 0
        %798 = vmatprep.subr.bf16.mxu0 0
        %799 = vmatpush1.bf16.msra.mxu0 0
        %800 = vmatprep.subr.bf16.mxu0 0
        %801 = vmatpush1.bf16.msra.mxu0 0
        %802 = vmatprep.subr.bf16.mxu0 0
        %803 = vmatpush1.bf16.msra.mxu0 0
        %804 = vmatprep.subr.bf16.mxu0 0
        %805 = vmatpush1.bf16.msra.mxu0 0
        %806 = vmatprep.subr.bf16.mxu0 0
        %807 = vmatpush1.bf16.msra.mxu0 0
        %808 = vmatprep.subr.bf16.mxu0 0
        %809 = vmatpush1.bf16.msra.mxu0 0
        %810 = vmatprep.subr.bf16.mxu0 0
        %811 = vmatpush1.bf16.msra.mxu0 0
        %812 = vmatprep.subr.bf16.mxu0 0
        %813 = vmatpush1.bf16.msra.mxu0 0
        %814 = vmatprep.subr.bf16.mxu0 0
        %815 = vmatpush1.bf16.msra.mxu0 0
        %816 = vmatprep.subr.bf16.mxu0 0
        %817 = vmatpush1.bf16.msra.mxu0 0
        %818 = vmatprep.subr.bf16.mxu0 0
        %819 = vmatpush1.bf16.msra.mxu0 0
        %820 = vmatprep.mubr.bf16.mxu0 0
        %821 = vmatmul.mubr.bf16.gmra.mrb[0].mxu0 %v722
        %v822 = vpop.f32.mrb[0].mxu0
        %v823 = vadd.f32 %v774, %v822
        %v824 = vpop.f32.mrb[0].mxu0
        %v825 = vpop.f32.mrb[0].mxu0
        %v826 = vadd.f32 %v774, %v825
        %v827 = vpop.f32.mrb[0].mxu0
        %828 = vdwg.mxu0
        %v829 = vmul.f32 %v759, 0.5
        %v830 = vmul.f32 %v762, 0.5
        %v831 = vmul.f32 %v759, 0.70710677
        %v832 = vmul.f32 %v762, 0.70710677
        %v833 = verf.f32.pop %v831
        %v834 = verf.f32.pop %v832
        %v835 = vadd.f32 %v833, 1.0
        %v836 = vadd.f32 %v834, 1.0
        %v837 = vmul.f32 %v829, %v835
        %v838 = vmul.f32 %v830, %v836
        %v839 = vmul.f32 %v823, 0.5
        %v840 = vmul.f32 %v826, 0.5
        %v841 = vmul.f32 %v823, 0.70710677
        %v842 = vmul.f32 %v826, 0.70710677
        %v843 = verf.f32.pop %v841
        %v844 = verf.f32.pop %v842
        %v845 = vadd.f32 %v843, 1.0
        %v846 = vadd.f32 %v844, 1.0
        %v847 = vmul.f32 %v839, %v845
        %v848 = vmul.f32 %v840, %v846
        %v849 = vld [vmem:[%s618] sm:$0x1]
        %v850 = vld [vmem:[%s621] sm:$0x1]
        %vm851 = vcmask 523264
        %v852 = vsel %vm851, %v847, 0.0
        %853 = vadd.xlane.f32.xlu0 %v852
        %v854 = vpop.xlane.xlu0 %853
        %v855 = vsel %vm851, %v848, 0.0
        %856 = vadd.xlane.f32.xlu0 %v855
        %v857 = vpop.xlane.xlu0 %856
        %v858 = vrcp.pop 64.0
        %v859 = vmul.f32 %v854, %v858
        %v860 = vmul.f32 %v857, %v858
        %v861 = vsub.f32 %v847, %v859
        %v862 = vsub.f32 %v848, %v860
        %v863 = vmul.f32 %v861, %v861
        %v864 = vmul.f32 %v862, %v862
        %v865 = vsel %vm851, %v863, 0.0
        %866 = vadd.xlane.f32.xlu0 %v865
        %v867 = vpop.xlane.xlu0 %866
        %v868 = vsel %vm851, %v864, 0.0
        %869 = vadd.xlane.f32.xlu0 %v868
        %v870 = vpop.xlane.xlu0 %869
        %v871 = vmul.f32 %v867, %v858
        %v872 = vmul.f32 %v870, %v858
        %v873 = vadd.f32 %v871, 1e-05
        %v874 = vadd.f32 %v872, 1e-05
        %v875 = vrsqrt.pop %v873
        %v876 = vrsqrt.pop %v874
        %v877 = vmul.f32 %v861, %v875
        %v878 = vmul.f32 %v862, %v876
        %v880 = vlaneseq
        %v881 = vshrl.u32 %v880, 7
        %v882 = vsub.s32 0, %v881
        %v883 = vrot.slane %v849, %v882
        %v885 = vmul.f32 %v877, %v883
        %v886 = vmul.f32 %v878, %v883
        %v888 = vlaneseq
        %v889 = vshrl.u32 %v888, 7
        %v890 = vsub.s32 0, %v889
        %v891 = vrot.slane %v850, %v890
        %v893 = vadd.f32 %v885, %v891
        %v894 = vadd.f32 %v886, %v891
        %v895 = vld [vmem:[%s625] sm:$0xf]
        %v896 = vld [vmem:[%s629] sm:$0xff]
        %v897 = vpack.c.bf16 %v893, %v893
        %899 = vset.pattern.permute.xlu0 0
        %900 = vperm.xlu0 %899, %v896
        %v901 = vpop.permute.xlu0 %900
        %vm903 = vcmask 64512
        %v905 = vsel %vm903, %v895, 0
        %vm907 = vcmask 1043456
        %v909 = vsel %vm907, %v897, 0
        %911 = vmatprep.subr.bf16.mxu0 0
        %912 = vmatpush1.bf16.msra.mxu0 %v909
        %913 = vmatprep.subr.bf16.mxu0 0
        %914 = vmatpush1.bf16.msra.mxu0 0
        %915 = vmatprep.subr.bf16.mxu0 0
        %916 = vmatpush1.bf16.msra.mxu0 0
        %917 = vmatprep.subr.bf16.mxu0 0
        %918 = vmatpush1.bf16.msra.mxu0 0
        %919 = vmatprep.subr.bf16.mxu0 0
        %920 = vmatpush1.bf16.msra.mxu0 0
        %921 = vmatprep.subr.bf16.mxu0 0
        %922 = vmatpush1.bf16.msra.mxu0 0
        %923 = vmatprep.subr.bf16.mxu0 0
        %924 = vmatpush1.bf16.msra.mxu0 0
        %925 = vmatprep.subr.bf16.mxu0 0
        %926 = vmatpush1.bf16.msra.mxu0 0
        %927 = vmatprep.subr.bf16.mxu0 0
        %928 = vmatpush1.bf16.msra.mxu0 0
        %929 = vmatprep.subr.bf16.mxu0 0
        %930 = vmatpush1.bf16.msra.mxu0 0
        %931 = vmatprep.subr.bf16.mxu0 0
        %932 = vmatpush1.bf16.msra.mxu0 0
        %933 = vmatprep.subr.bf16.mxu0 0
        %934 = vmatpush1.bf16.msra.mxu0 0
        %935 = vmatprep.subr.bf16.mxu0 0
        %936 = vmatpush1.bf16.msra.mxu0 0
        %937 = vmatprep.subr.bf16.mxu0 0
        %938 = vmatpush1.bf16.msra.mxu0 0
        %939 = vmatprep.subr.bf16.mxu0 0
        %940 = vmatpush1.bf16.msra.mxu0 0
        %941 = vmatprep.subr.bf16.mxu0 0
        %942 = vmatpush1.bf16.msra.mxu0 0
        %943 = vmatprep.mubr.bf16.mxu0 0
        %944 = vmatmul.mubr.bf16.gmra.mrb[0].mxu0 %v905
        %v945 = vpop.f32.mrb[0].mxu0
        %v946 = vadd.f32 %v901, %v945
        %v947 = vpop.f32.mrb[0].mxu0
        %v948 = vpop.f32.mrb[0].mxu0
        %v949 = vpop.f32.mrb[0].mxu0
        %950 = vdwg.mxu0
        %v951 = vpack.c.bf16 %v894, %v894
        %v953 = vsel %vm907, %v951, 0
        %955 = vmatprep.subr.bf16.mxu0 0
        %956 = vmatpush1.bf16.msra.mxu0 %v953
        %957 = vmatprep.subr.bf16.mxu0 0
        %958 = vmatpush1.bf16.msra.mxu0 0
        %959 = vmatprep.subr.bf16.mxu0 0
        %960 = vmatpush1.bf16.msra.mxu0 0
        %961 = vmatprep.subr.bf16.mxu0 0
        %962 = vmatpush1.bf16.msra.mxu0 0
        %963 = vmatprep.subr.bf16.mxu0 0
        %964 = vmatpush1.bf16.msra.mxu0 0
        %965 = vmatprep.subr.bf16.mxu0 0
        %966 = vmatpush1.bf16.msra.mxu0 0
        %967 = vmatprep.subr.bf16.mxu0 0
        %968 = vmatpush1.bf16.msra.mxu0 0
        %969 = vmatprep.subr.bf16.mxu0 0
        %970 = vmatpush1.bf16.msra.mxu0 0
        %971 = vmatprep.subr.bf16.mxu0 0
        %972 = vmatpush1.bf16.msra.mxu0 0
        %973 = vmatprep.subr.bf16.mxu0 0
        %974 = vmatpush1.bf16.msra.mxu0 0
        %975 = vmatprep.subr.bf16.mxu0 0
        %976 = vmatpush1.bf16.msra.mxu0 0
        %977 = vmatprep.subr.bf16.mxu0 0
        %978 = vmatpush1.bf16.msra.mxu0 0
        %979 = vmatprep.subr.bf16.mxu0 0
        %980 = vmatpush1.bf16.msra.mxu0 0
        %981 = vmatprep.subr.bf16.mxu0 0
        %982 = vmatpush1.bf16.msra.mxu0 0
        %983 = vmatprep.subr.bf16.mxu0 0
        %984 = vmatpush1.bf16.msra.mxu0 0
        %985 = vmatprep.subr.bf16.mxu0 0
        %986 = vmatpush1.bf16.msra.mxu0 0
        %987 = vmatprep.mubr.bf16.mxu0 0
        %988 = vmatmul.mubr.bf16.gmra.mrb[0].mxu0 %v905
        %v989 = vpop.f32.mrb[0].mxu0
        %v990 = vadd.f32 %v901, %v989
        %v991 = vpop.f32.mrb[0].mxu0
        %v992 = vpop.f32.mrb[0].mxu0
        %v993 = vpop.f32.mrb[0].mxu0
        %994 = vdwg.mxu0
        %v995 = vmul.f32 %v837, %v946
        %v996 = vmul.f32 %v838, %v990
        %v997 = vpack.c.bf16 %v996, %v995
        %v998 = vld [vmem:[%s634] sm:$0xf]
        %v999 = vld [vmem:[%s634 + $0x4] sm:$0xf]
        %v1000 = vld [vmem:[%s634 + $0x8] sm:$0xf]
        %v1001 = vld [vmem:[%s634 + $0xc] sm:$0xf]
        %v1002 = vld [vmem:[%s634 + $0x10] sm:$0xf]
        %v1003 = vld [vmem:[%s634 + $0x14] sm:$0xf]
        %v1004 = vld [vmem:[%s634 + $0x18] sm:$0xf]
        %v1005 = vld [vmem:[%s634 + $0x1c] sm:$0xf]
        %v1006 = vld [vmem:[%s637] sm:$0x1]
        %v1008 = vlaneseq
        %v1009 = vshrl.u32 %v1008, 7
        %v1010 = vsub.s32 0, %v1009
        %v1011 = vrot.slane %v1006, %v1010
        %v1021 = vunpack.c.l.b16 %v998
        %v1022 = vunpack.c.l.b16 %v999
        %v1023 = vunpack.c.l.b16 %v1000
        %v1024 = vunpack.c.l.b16 %v1001
        %v1025 = vunpack.c.l.b16 %v1002
        %v1026 = vunpack.c.l.b16 %v1003
        %v1027 = vunpack.c.l.b16 %v1004
        %v1028 = vunpack.c.l.b16 %v1005
        %v1029 = vpack.c.b16 %v1022, %v1021
        %v1030 = vpack.c.b16 %v1024, %v1023
        %v1031 = vpack.c.b16 %v1026, %v1025
        %v1032 = vpack.c.b16 %v1028, %v1027
        %v1038 = vsel %vm851, %v997, 0
        %1040 = vmatprep.subr.bf16.mxu0 0
        %1041 = vmatpush1.bf16.msra.mxu0 %v1029
        %1042 = vmatprep.subr.bf16.mxu0 0
        %1043 = vmatpush1.bf16.msra.mxu0 %v1030
        %1044 = vmatprep.subr.bf16.mxu0 0
        %1045 = vmatpush1.bf16.msra.mxu0 %v1031
        %1046 = vmatprep.subr.bf16.mxu0 0
        %1047 = vmatpush1.bf16.msra.mxu0 %v1032
        %1048 = vmatprep.subr.bf16.mxu0 0
        %1049 = vmatpush1.bf16.msra.mxu0 0
        %1050 = vmatprep.subr.bf16.mxu0 0
        %1051 = vmatpush1.bf16.msra.mxu0 0
        %1052 = vmatprep.subr.bf16.mxu0 0
        %1053 = vmatpush1.bf16.msra.mxu0 0
        %1054 = vmatprep.subr.bf16.mxu0 0
        %1055 = vmatpush1.bf16.msra.mxu0 0
        %1056 = vmatprep.subr.bf16.mxu0 0
        %1057 = vmatpush1.bf16.msra.mxu0 0
        %1058 = vmatprep.subr.bf16.mxu0 0
        %1059 = vmatpush1.bf16.msra.mxu0 0
        %1060 = vmatprep.subr.bf16.mxu0 0
        %1061 = vmatpush1.bf16.msra.mxu0 0
        %1062 = vmatprep.subr.bf16.mxu0 0
        %1063 = vmatpush1.bf16.msra.mxu0 0
        %1064 = vmatprep.subr.bf16.mxu0 0
        %1065 = vmatpush1.bf16.msra.mxu0 0
        %1066 = vmatprep.subr.bf16.mxu0 0
        %1067 = vmatpush1.bf16.msra.mxu0 0
        %1068 = vmatprep.subr.bf16.mxu0 0
        %1069 = vmatpush1.bf16.msra.mxu0 0
        %1070 = vmatprep.subr.bf16.mxu0 0
        %1071 = vmatpush1.bf16.msra.mxu0 0
        %1072 = vmatprep.mubr.bf16.mxu0 0
        %1073 = vmatmul.mubr.bf16.gmra.mrb[0].mxu0 %v1038
        %v1074 = vpop.f32.mrb[0].mxu0
        %v1075 = vadd.f32 %v1011, %v1074
        %v1076 = vpop.f32.mrb[0].mxu0
        %v1077 = vpop.f32.mrb[0].mxu0
        %v1078 = vadd.f32 %v1011, %v1077
        %v1079 = vpop.f32.mrb[0].mxu0
        %1080 = vdwg.mxu0
        %v1081 = vadd.f32 %v1075, %v649
        %v1082 = vadd.f32 %v1078, %v650
        %1083 = vst.msk [vmem:[#allocation2] sm:$0xff] %vm653, %v1081
        %1084 = vst.msk [vmem:[#allocation2 + $0x8] sm:$0xff] %vm653, %v1082
        // Predicated region
        $region77: #{tpu_custom_call.1} parent=71 // pred_check
          %p1085 = pneg %p393
        $region78: #{tpu_custom_call.1} parent=71 // pred_check_branch
          %1087 = sbr.rel (%p1085) target = $region80
        $region79: #{tpu_custom_call.1} parent=71 // pred_region
          %s1088 = smul.u32 2, %s29
          %s1090 = ssub.s32 256, 256
          %1091 = vsyncadd [#allocation3], %s1090
          %s1092 = smul.addr %s1088, 128
          %s1093 = scalar_lea.hbm %s13, %s1092
          %s1094 = sshll.u32 [#allocation2], 4
          %s1095 = int_to_ptr.vmem [resolvable:$true] %s1094
          %1100 = dma.vmem_to_hbm [thread:$0]  %s1095, 256, %s1093, [#allocation3], 128, 128, 8
        $region80: #{tpu_custom_call.1} parent=71 // pred_fallthru
          _
        // Predicated region
        $region81: #{tpu_custom_call.1} parent=71 // pred_check
          %p1101 = pneg %p393
        $region82: #{tpu_custom_call.1} parent=71 // pred_check_branch
          %1103 = sbr.rel (%p1101) target = $region84
        $region83: #{tpu_custom_call.1} parent=71 // pred_region
          %1104 = dma.done [#allocation3], 256
        $region84: #{tpu_custom_call.1} parent=71 // pred_fallthru
          _
      $region72: #{tpu_custom_call.1} parent=5 // pred_fallthru
        _
      %p1105 = scmp.le.s32.totalorder 2, %s20
      // Predicated region
      $region85: #{tpu_custom_call.1} parent=5 // pred_check
        %p1106 = pneg %p1105
      $region86: #{tpu_custom_call.1} parent=5 // pred_check_branch
        %1108 = sbr.rel (%p1106) target = $region88
      $region87: #{tpu_custom_call.1} parent=5 // pred_region
        %s1109 = ssub.s32 %s20, 2
      $region88: #{tpu_custom_call.1} parent=5 // pred_fallthru
        _
    $region6: #{tpu_custom_call.1} parent=1 // loop_footer
      %s24 = sadd.s32 1, %s20
    $region7: #{tpu_custom_call.1} parent=1 // loop_footer_branch
      %19 = sbr.rel target = $region3
    $region8: #{tpu_custom_call.1} parent=1 // loop_exit
      _
    %1110 = vsyncpa [#allocation3], 1
    %s1111 = scalar_lea.sflag [#allocation3], 1
    %1112 = vsyncpa %s1111, 1

</llo_original>
